<compile_context>
chip_gen: v7x
topology: tpu7x:2x2x1
jax: 0.10.0
libtpu: 0.0.40
codegen_flags: <defaults>
</compile_context>

<pallas_src>
import jax
import jax.numpy as jnp
from jax import lax
from jax.experimental import pallas as pl
from jax.experimental.pallas import tpu as pltpu


def _round_up(x, m):
    return ((x + m - 1) // m) * m


def char_rnn_seq_kernel(idx_ref, h0_ref, emb_ref, w_ih_cat_ref, w_hh_cat_ref,
                        b_gi_ref, b_hhn_ref, w_dec_ref, b_dec_ref,
                        out_ref, h_out_ref,
                        x_ref, gi_ref, hs_ref):
    """Runs T GRU timesteps fully inside one kernel invocation.

    idx_ref      : SMEM (T,) int32 character indices (pre-clamped on host)
    h0_ref       : VMEM (1, Hp) f32   initial hidden (lane-padded, pad == 0)
    emb_ref      : VMEM (V, Hp) f32   embedding table (lane-padded)
    w_ih_cat_ref : VMEM (Hp, 3Hp) bf16  W_ih.T, one 128-lane block per gate
    w_hh_cat_ref : VMEM (Hp, 3Hp) bf16  W_hh.T, one 128-lane block per gate
    b_gi_ref     : VMEM (1, 3Hp) f32  b_ih (+ b_hh for r,z) folded for the gi slab
    b_hhn_ref    : VMEM (1, Hp)  f32  b_hh[n-gate] (must stay inside r*(...))
    w_dec_ref    : VMEM (Hp, Op) bf16 decoder weight, pre-transposed
    b_dec_ref    : VMEM (1, Op)  f32
    out_ref      : VMEM (Tp, Op) f32  per-step logits (lane-dense, one store)
    h_out_ref    : VMEM (1, Hp)  f32  final hidden
    x_ref        : VMEM (Tp, Hp)  f32 scratch: gathered embedding rows
    gi_ref       : VMEM (Tp, 3Hp) f32 scratch: batched input projections
    hs_ref       : VMEM (Tp, Hp)  f32 scratch: per-step hidden states
    """
    T = idx_ref.shape[0]
    Hp = h0_ref.shape[-1]
    mxu_dtype = w_hh_cat_ref.dtype

    # Deterministic contents for the Tp-padded tail rows.
    x_ref[...] = jnp.zeros_like(x_ref)
    hs_ref[...] = jnp.zeros_like(hs_ref)

    # ---- Batched pre-loop work -------------------------------------------
    # 1) Gather the T embedding rows into a (Tp, Hp) slab (VMEM row gather
    #    driven by SMEM scalar reads).
    @pl.loop(0, T)
    def _(t):
        x_ref[pl.ds(t, 1), :] = emb_ref[pl.ds(idx_ref[t], 1), :]

    # 2) gi = X @ W_ih_cat + folded biases: one M=T matmul instead of T M=1.
    gi_ref[...] = jnp.dot(x_ref[...].astype(mxu_dtype), w_ih_cat_ref[...],
                          preferred_element_type=jnp.float32) + b_gi_ref[...]

    # ---- Serial recurrence: only h @ W_hh_cat remains per step -------------
    b_hhn = b_hhn_ref[...]          # hoisted: loop-invariant (1, Hp) load

    def step(t, h):
        gh = jnp.dot(h.astype(mxu_dtype), w_hh_cat_ref[...],
                     preferred_element_type=jnp.float32)           # (1, 3Hp)
        gi = gi_ref[pl.ds(t, 1), :]                                 # (1, 3Hp)
        # Gate slices fall on 128-lane boundaries -> free view offsets.
        r = jax.nn.sigmoid(gi[:, 0:Hp] + gh[:, 0:Hp])
        z = jax.nn.sigmoid(gi[:, Hp:2 * Hp] + gh[:, Hp:2 * Hp])
        n = jnp.tanh(gi[:, 2 * Hp:3 * Hp]
                     + r * (gh[:, 2 * Hp:3 * Hp] + b_hhn))
        h_new = (1.0 - z) * n + z * h                               # (1, Hp)
        hs_ref[pl.ds(t, 1), :] = h_new                              # for decoder
        return h_new

    # Hidden state stays in the loop carry (vregs); bounded unroll keeps
    # compile time / imem sane for long sequences.
    h_final = lax.fori_loop(0, T, step, h0_ref[...], unroll=min(T, 8))
    h_out_ref[...] = h_final

    # ---- Batched post-loop decoder: one M=T matmul, one dense store --------
    out_ref[...] = jnp.dot(hs_ref[...].astype(mxu_dtype), w_dec_ref[...],
                           preferred_element_type=jnp.float32) + b_dec_ref[...]


def prepare_params(params, mxu_dtype=jnp.bfloat16):
    """Host-side, one-time re-layout of PyTorch-style parameters.

    Pre-transposes every weight, pads feature axes to 128 lanes, puts each GRU
    gate on its own 128-lane block, folds biases into the batched matmuls and
    casts MXU weight operands to bf16 (accumulation stays f32).
    """
    emb, w_ih, w_hh, b_ih, b_hh, w_dec, b_dec = params
    V, H = emb.shape
    O = w_dec.shape[0]
    Hp = _round_up(H, 128)
    Op = _round_up(O, 128)
    f32 = jnp.float32

    # Embedding table kept f32: row-gather traffic is tiny and the dynamic
    # sublane slice stays on a 32-bit layout.  (See module TODO for HBM/DMA.)
    emb_p = jnp.zeros((V, Hp), f32).at[:, :H].set(emb.astype(f32))

    w_ih_cat = jnp.zeros((Hp, 3 * Hp), f32)
    w_hh_cat = jnp.zeros((Hp, 3 * Hp), f32)
    for g in range(3):                       # gate order [r | z | n]
        w_ih_cat = w_ih_cat.at[:H, g * Hp:g * Hp + H].set(w_ih[g * H:(g + 1) * H, :].T)
        w_hh_cat = w_hh_cat.at[:H, g * Hp:g * Hp + H].set(w_hh[g * H:(g + 1) * H, :].T)

    # Fold b_ih (all gates) + b_hh (r,z only) into the batched gi slab.
    # b_hh[n] cannot be folded: GRU needs n = tanh(gi_n + r*(gh_n + b_hh_n)).
    b_gi = jnp.zeros((1, 3 * Hp), f32)
    b_gi = b_gi.at[0, 0 * Hp:0 * Hp + H].set(b_ih[0:H] + b_hh[0:H])
    b_gi = b_gi.at[0, 1 * Hp:1 * Hp + H].set(b_ih[H:2 * H] + b_hh[H:2 * H])
    b_gi = b_gi.at[0, 2 * Hp:2 * Hp + H].set(b_ih[2 * H:3 * H])
    b_hh_n = jnp.zeros((1, Hp), f32).at[0, :H].set(b_hh[2 * H:3 * H])

    w_dec_t = jnp.zeros((Hp, Op), f32).at[:H, :O].set(w_dec.T)
    b_dec_p = jnp.zeros((1, Op), f32).at[0, :O].set(b_dec)

    return dict(emb_p=emb_p,
                w_ih_cat=w_ih_cat.astype(mxu_dtype),
                w_hh_cat=w_hh_cat.astype(mxu_dtype),
                b_gi=b_gi, b_hh_n=b_hh_n,
                w_dec_t=w_dec_t.astype(mxu_dtype), b_dec_p=b_dec_p,
                H=H, O=O, Hp=Hp, Op=Op, V=V, mxu_dtype=mxu_dtype)


def char_rnn_sequence(idx_seq, hidden, prepped):
    """Runs the whole (T,) int32 character sequence in one pallas_call.

    Returns (logits (T, O), hidden (1, 1, H)).
    """
    H, O, Hp, Op, V = (prepped["H"], prepped["O"], prepped["Hp"],
                       prepped["Op"], prepped["V"])
    T = int(idx_seq.shape[0])
    Tp = _round_up(max(T, 1), 8)       # sublane-aligned slab / output rows

    # VMEM gathers are not bounds-checked at runtime: clamp in the real path.
    idx = jnp.clip(idx_seq.astype(jnp.int32), 0, V - 1)

    h0 = jnp.zeros((1, Hp), jnp.float32).at[:, :H].set(
        hidden.reshape(1, H).astype(jnp.float32))

    out_p, h_p = pl.pallas_call(
        char_rnn_seq_kernel,
        out_shape=(jax.ShapeDtypeStruct((Tp, Op), jnp.float32),
                   jax.ShapeDtypeStruct((1, Hp), jnp.float32)),
        in_specs=[pl.BlockSpec(memory_space=pltpu.MemorySpace.SMEM)]   # idx seq
                 + [pl.BlockSpec(memory_space=pltpu.MemorySpace.VMEM)] * 8,
        out_specs=(pl.BlockSpec(memory_space=pltpu.MemorySpace.VMEM),
                   pl.BlockSpec(memory_space=pltpu.MemorySpace.VMEM)),
        scratch_shapes=[
            pltpu.VMEM((Tp, Hp), jnp.float32),       # gathered embeddings X
            pltpu.VMEM((Tp, 3 * Hp), jnp.float32),   # batched gi slab
            pltpu.VMEM((Tp, Hp), jnp.float32),       # per-step hidden states
        ],
    )(idx, h0,
      prepped["emb_p"], prepped["w_ih_cat"], prepped["w_hh_cat"],
      prepped["b_gi"], prepped["b_hh_n"], prepped["w_dec_t"], prepped["b_dec_p"])

    return out_p[:T, :O], h_p[:, :H].reshape(1, 1, H)


def char_rnn_forward(idx, hidden, prepped):
    """Single-step forward matching CharRNN.forward: idx (1,), hidden (1,1,H)."""
    outs, h_new = char_rnn_sequence(idx.reshape(-1), hidden, prepped)
    return outs[-1:], h_new


def char_rnn_reference_step(idx_scalar, h, params, mxu_dtype=jnp.bfloat16):
    """Pure-JAX reference mirroring torch nn.Embedding + nn.GRU + nn.Linear,
    with the same bf16-operand / f32-accumulate matmul precision as the kernel."""
    emb, w_ih, w_hh, b_ih, b_hh, w_dec, b_dec = params
    H = emb.shape[1]
    c = lambda a: a.astype(mxu_dtype)
    x = emb[idx_scalar][None, :]
    gi = jnp.dot(c(x), c(w_ih).T, preferred_element_type=jnp.float32) + b_ih
    gh = jnp.dot(c(h), c(w_hh).T, preferred_element_type=jnp.float32) + b_hh
    r = jax.nn.sigmoid(gi[:, 0:H] + gh[:, 0:H])
    z = jax.nn.sigmoid(gi[:, H:2 * H] + gh[:, H:2 * H])
    n = jnp.tanh(gi[:, 2 * H:3 * H] + r * gh[:, 2 * H:3 * H])
    h_new = (1.0 - z) * n + z * h
    out = jnp.dot(c(h_new), c(w_dec).T, preferred_element_type=jnp.float32) + b_dec
    return out, h_new


if __name__ == "__main__":
    vocab = 64        # input_size == output_size (typical char-RNN)
    hidden_size = 32
    output_size = 64
    n_layers = 1
    T = 8             # characters fused into a single kernel launch

    key = jax.random.PRNGKey(0)
    ks = jax.random.split(key, 9)
    scale = 0.1
    emb   = scale * jax.random.normal(ks[0], (vocab, hidden_size), jnp.float32)
    w_ih  = scale * jax.random.normal(ks[1], (3 * hidden_size, hidden_size), jnp.float32)
    w_hh  = scale * jax.random.normal(ks[2], (3 * hidden_size, hidden_size), jnp.float32)
    b_ih  = scale * jax.random.normal(ks[3], (3 * hidden_size,), jnp.float32)
    b_hh  = scale * jax.random.normal(ks[4], (3 * hidden_size,), jnp.float32)
    w_dec = scale * jax.random.normal(ks[5], (output_size, hidden_size), jnp.float32)
    b_dec = scale * jax.random.normal(ks[6], (output_size,), jnp.float32)
    params = (emb, w_ih, w_hh, b_ih, b_hh, w_dec, b_dec)
    prepped = prepare_params(params)

    idx_seq = jax.random.randint(ks[7], (T,), 0, vocab, dtype=jnp.int32)
    hidden0 = 0.5 * jax.random.normal(ks[8], (n_layers, 1, hidden_size), jnp.float32)

    # Fused-sequence kernel: T timesteps in one pallas_call.
    outs, h_final = char_rnn_sequence(idx_seq, hidden0, prepped)
    outs = jax.block_until_ready(outs)
    h_final = jax.block_until_ready(h_final)

    # Reference: step the pure-JAX model T times (same bf16 matmul precision).
    h_ref = hidden0.reshape(1, hidden_size)
    ref_rows = []
    for t in range(T):
        o_ref, h_ref = char_rnn_reference_step(int(idx_seq[t]), h_ref, params,
                                               mxu_dtype=prepped["mxu_dtype"])
        ref_rows.append(o_ref)
    outs_ref = jnp.concatenate(ref_rows, axis=0)

    assert outs.shape == (T, output_size)
    assert h_final.shape == (n_layers, 1, hidden_size)
    assert jnp.allclose(outs, outs_ref, rtol=2e-3, atol=2e-3)
    assert jnp.allclose(h_final.reshape(1, hidden_size), h_ref, rtol=2e-3, atol=2e-3)

    # Single-step call with the exact CharRNN.forward signature (one char).
    out1, h1 = char_rnn_forward(idx_seq[:1], hidden0, prepped)
    out1 = jax.block_until_ready(out1)
    o1_ref, h1_ref = char_rnn_reference_step(int(idx_seq[0]),
                                             hidden0.reshape(1, hidden_size),
                                             params, mxu_dtype=prepped["mxu_dtype"])
    assert out1.shape == (1, output_size) and h1.shape == (n_layers, 1, hidden_size)
    assert jnp.allclose(out1, o1_ref, rtol=2e-3, atol=2e-3)
    assert jnp.allclose(h1.reshape(1, hidden_size), h1_ref, rtol=2e-3, atol=2e-3)

    print("KERNEL_OK")
</pallas_src>

<mosaic_0001>
module attributes {stable_mosaic.version = 11 : i64} {
  func.func @char_rnn_seq_kernel(%arg0: memref<8xi32, #tpu.memory_space<smem>>, %arg1: memref<1x128xf32, #tpu.memory_space<vmem>>, %arg2: memref<64x128xf32, #tpu.memory_space<vmem>>, %arg3: memref<128x384xbf16, #tpu.memory_space<vmem>>, %arg4: memref<128x384xbf16, #tpu.memory_space<vmem>>, %arg5: memref<1x384xf32, #tpu.memory_space<vmem>>, %arg6: memref<1x128xf32, #tpu.memory_space<vmem>>, %arg7: memref<128x128xbf16, #tpu.memory_space<vmem>>, %arg8: memref<1x128xf32, #tpu.memory_space<vmem>>, %arg9: memref<8x128xf32, #tpu.memory_space<vmem>>, %arg10: memref<1x128xf32, #tpu.memory_space<vmem>>, %arg11: memref<8x128xf32, #tpu.memory_space<vmem>>, %arg12: memref<8x384xf32, #tpu.memory_space<vmem>>, %arg13: memref<8x128xf32, #tpu.memory_space<vmem>>) attributes {dimension_semantics = [], scalar_prefetch = 0 : i64, scratch_operands = 3 : i64, tpu.core_type = #tpu.core_type<tc>} {
    %cst = arith.constant 0.000000e+00 : f32
    %0 = vector.broadcast %cst : f32 to vector<8x128xf32>
    %c0 = arith.constant 0 : index
    %c0_0 = arith.constant 0 : index
    %1 = vector.load %arg11[%c0, %c0_0] : memref<8x128xf32, #tpu.memory_space<vmem>>, vector<8x128xf32>
    tpu.vector_store %arg11[%c0, %c0_0], %0 {strides = array<i32>} : memref<8x128xf32, #tpu.memory_space<vmem>>, vector<8x128xf32>,
    %cst_1 = arith.constant 0.000000e+00 : f32
    %2 = vector.broadcast %cst_1 : f32 to vector<8x128xf32>
    %c0_2 = arith.constant 0 : index
    %c0_3 = arith.constant 0 : index
    %3 = vector.load %arg13[%c0_2, %c0_3] : memref<8x128xf32, #tpu.memory_space<vmem>>, vector<8x128xf32>
    tpu.vector_store %arg13[%c0_2, %c0_3], %2 {strides = array<i32>} : memref<8x128xf32, #tpu.memory_space<vmem>>, vector<8x128xf32>,
    %c0_i32 = arith.constant 0 : i32
    %c8_i32 = arith.constant 8 : i32
    %4 = arith.addi %c0_i32, %c8_i32 : i32
    %c1_i32 = arith.constant 1 : i32
    scf.for %arg14 = %c0_i32 to %4 step %c1_i32  : i32 {
      %c1_i32_96 = arith.constant 1 : i32
      %296 = arith.muli %arg14, %c1_i32_96 : i32
      %c0_i32_97 = arith.constant 0 : i32
      %297 = arith.addi %c0_i32_97, %296 : i32
      %298 = arith.index_cast %297 : i32 to index
      %299 = memref.load %arg0[%298] : memref<8xi32, #tpu.memory_space<smem>>
      %300 = arith.index_cast %299 : i32 to index
      %c0_98 = arith.constant 0 : index
      %301 = vector.load %arg2[%300, %c0_98] : memref<64x128xf32, #tpu.memory_space<vmem>>, vector<1x128xf32>
      %302 = arith.index_cast %297 : i32 to index
      %c0_99 = arith.constant 0 : index
      %303 = vector.load %arg11[%302, %c0_99] : memref<8x128xf32, #tpu.memory_space<vmem>>, vector<1x128xf32>
      tpu.vector_store %arg11[%302, %c0_99], %301 {strides = array<i32>} : memref<8x128xf32, #tpu.memory_space<vmem>>, vector<1x128xf32>,
    }
    %c8_i32_4 = arith.constant 8 : i32
    %c0_5 = arith.constant 0 : index
    %c0_6 = arith.constant 0 : index
    %5 = vector.load %arg11[%c0_5, %c0_6] : memref<8x128xf32, #tpu.memory_space<vmem>>, vector<8x128xf32>
    %6 = arith.truncf %5 : vector<8x128xf32> to vector<8x128xbf16>
    %c0_7 = arith.constant 0 : index
    %c0_8 = arith.constant 0 : index
    %7 = vector.load %arg3[%c0_7, %c0_8] : memref<128x384xbf16, #tpu.memory_space<vmem>>, vector<128x384xbf16>
    %cst_9 = arith.constant dense<0.000000e+00> : vector<8x384xf32>
    %8 = tpu.matmul %6, %7, %cst_9 {dimension_numbers = #tpu.dot_dimension_numbers<[1], [0], [0], [1], [0, 0, 1, 1], [], []>} : vector<8x128xbf16>, vector<128x384xbf16>, vector<8x384xf32> -> vector<8x384xf32>
    %c0_10 = arith.constant 0 : index
    %c0_11 = arith.constant 0 : index
    %9 = vector.load %arg5[%c0_10, %c0_11] : memref<1x384xf32, #tpu.memory_space<vmem>>, vector<1x384xf32>
    %10 = vector.broadcast %9 : vector<1x384xf32> to vector<8x384xf32>
    %11 = arith.addf %8, %10 : vector<8x384xf32>
    %c0_12 = arith.constant 0 : index
    %c0_13 = arith.constant 0 : index
    %12 = vector.load %arg12[%c0_12, %c0_13] : memref<8x384xf32, #tpu.memory_space<vmem>>, vector<8x384xf32>
    tpu.vector_store %arg12[%c0_12, %c0_13], %11 {strides = array<i32>} : memref<8x384xf32, #tpu.memory_space<vmem>>, vector<8x384xf32>,
    %c0_14 = arith.constant 0 : index
    %c0_15 = arith.constant 0 : index
    %13 = vector.load %arg6[%c0_14, %c0_15] : memref<1x128xf32, #tpu.memory_space<vmem>>, vector<1x128xf32>
    %c0_16 = arith.constant 0 : index
    %c0_17 = arith.constant 0 : index
    %14 = vector.load %arg1[%c0_16, %c0_17] : memref<1x128xf32, #tpu.memory_space<vmem>>, vector<1x128xf32>
    %c0_i32_18 = arith.constant 0 : i32
    %15 = arith.truncf %14 : vector<1x128xf32> to vector<1x128xbf16>
    %c0_19 = arith.constant 0 : index
    %c0_20 = arith.constant 0 : index
    %16 = vector.load %arg4[%c0_19, %c0_20] : memref<128x384xbf16, #tpu.memory_space<vmem>>, vector<128x384xbf16>
    %cst_21 = arith.constant dense<0.000000e+00> : vector<1x384xf32>
    %17 = tpu.matmul %15, %16, %cst_21 {dimension_numbers = #tpu.dot_dimension_numbers<[1], [0], [0], [1], [0, 0, 1, 1], [], []>} : vector<1x128xbf16>, vector<128x384xbf16>, vector<1x384xf32> -> vector<1x384xf32>
    %18 = arith.index_cast %c0_i32_18 : i32 to index
    %c0_22 = arith.constant 0 : index
    %19 = vector.load %arg12[%18, %c0_22] : memref<8x384xf32, #tpu.memory_space<vmem>>, vector<1x384xf32>
    %20 = vector.extract_strided_slice %19 {offsets = [0, 0], sizes = [1, 128], strides = [1, 1]} : vector<1x384xf32> to vector<1x128xf32>
    %21 = vector.extract_strided_slice %17 {offsets = [0, 0], sizes = [1, 128], strides = [1, 1]} : vector<1x384xf32> to vector<1x128xf32>
    %22 = arith.addf %20, %21 : vector<1x128xf32>
    %23 = arith.negf %22 : vector<1x128xf32>
    %24 = math.exp %23 : vector<1x128xf32>
    %cst_23 = arith.constant 1.000000e+00 : f32
    %25 = vector.broadcast %cst_23 : f32 to vector<1x128xf32>
    %26 = arith.addf %25, %24 : vector<1x128xf32>
    %27 = arith.divf %25, %26 : vector<1x128xf32>
    %28 = vector.extract_strided_slice %19 {offsets = [0, 128], sizes = [1, 128], strides = [1, 1]} : vector<1x384xf32> to vector<1x128xf32>
    %29 = vector.extract_strided_slice %17 {offsets = [0, 128], sizes = [1, 128], strides = [1, 1]} : vector<1x384xf32> to vector<1x128xf32>
    %30 = arith.addf %28, %29 : vector<1x128xf32>
    %31 = arith.negf %30 : vector<1x128xf32>
    %32 = math.exp %31 : vector<1x128xf32>
    %cst_24 = arith.constant 1.000000e+00 : f32
    %33 = vector.broadcast %cst_24 : f32 to vector<1x128xf32>
    %34 = arith.addf %33, %32 : vector<1x128xf32>
    %35 = arith.divf %33, %34 : vector<1x128xf32>
    %36 = vector.extract_strided_slice %19 {offsets = [0, 256], sizes = [1, 128], strides = [1, 1]} : vector<1x384xf32> to vector<1x128xf32>
    %37 = vector.extract_strided_slice %17 {offsets = [0, 256], sizes = [1, 128], strides = [1, 1]} : vector<1x384xf32> to vector<1x128xf32>
    %38 = arith.addf %37, %13 : vector<1x128xf32>
    %39 = arith.mulf %27, %38 : vector<1x128xf32>
    %40 = arith.addf %36, %39 : vector<1x128xf32>
    %41 = math.tanh %40 : vector<1x128xf32>
    %cst_25 = arith.constant 1.000000e+00 : f32
    %42 = vector.broadcast %cst_25 : f32 to vector<1x128xf32>
    %43 = arith.subf %42, %35 : vector<1x128xf32>
    %44 = arith.mulf %43, %41 : vector<1x128xf32>
    %45 = arith.mulf %35, %14 : vector<1x128xf32>
    %46 = arith.addf %44, %45 : vector<1x128xf32>
    %47 = arith.index_cast %c0_i32_18 : i32 to index
    %c0_26 = arith.constant 0 : index
    %48 = vector.load %arg13[%47, %c0_26] : memref<8x128xf32, #tpu.memory_space<vmem>>, vector<1x128xf32>
    tpu.vector_store %arg13[%47, %c0_26], %46 {strides = array<i32>} : memref<8x128xf32, #tpu.memory_space<vmem>>, vector<1x128xf32>,
    %c1_i32_27 = arith.constant 1 : i32
    %49 = arith.truncf %46 : vector<1x128xf32> to vector<1x128xbf16>
    %c0_28 = arith.constant 0 : index
    %c0_29 = arith.constant 0 : index
    %50 = vector.load %arg4[%c0_28, %c0_29] : memref<128x384xbf16, #tpu.memory_space<vmem>>, vector<128x384xbf16>
    %cst_30 = arith.constant dense<0.000000e+00> : vector<1x384xf32>
    %51 = tpu.matmul %49, %50, %cst_30 {dimension_numbers = #tpu.dot_dimension_numbers<[1], [0], [0], [1], [0, 0, 1, 1], [], []>} : vector<1x128xbf16>, vector<128x384xbf16>, vector<1x384xf32> -> vector<1x384xf32>
    %52 = arith.index_cast %c1_i32_27 : i32 to index
    %c0_31 = arith.constant 0 : index
    %53 = vector.load %arg12[%52, %c0_31] : memref<8x384xf32, #tpu.memory_space<vmem>>, vector<1x384xf32>
    %54 = vector.extract_strided_slice %53 {offsets = [0, 0], sizes = [1, 128], strides = [1, 1]} : vector<1x384xf32> to vector<1x128xf32>
    %55 = vector.extract_strided_slice %51 {offsets = [0, 0], sizes = [1, 128], strides = [1, 1]} : vector<1x384xf32> to vector<1x128xf32>
    %56 = arith.addf %54, %55 : vector<1x128xf32>
    %57 = arith.negf %56 : vector<1x128xf32>
    %58 = math.exp %57 : vector<1x128xf32>
    %cst_32 = arith.constant 1.000000e+00 : f32
    %59 = vector.broadcast %cst_32 : f32 to vector<1x128xf32>
    %60 = arith.addf %59, %58 : vector<1x128xf32>
    %61 = arith.divf %59, %60 : vector<1x128xf32>
    %62 = vector.extract_strided_slice %53 {offsets = [0, 128], sizes = [1, 128], strides = [1, 1]} : vector<1x384xf32> to vector<1x128xf32>
    %63 = vector.extract_strided_slice %51 {offsets = [0, 128], sizes = [1, 128], strides = [1, 1]} : vector<1x384xf32> to vector<1x128xf32>
    %64 = arith.addf %62, %63 : vector<1x128xf32>
    %65 = arith.negf %64 : vector<1x128xf32>
    %66 = math.exp %65 : vector<1x128xf32>
    %cst_33 = arith.constant 1.000000e+00 : f32
    %67 = vector.broadcast %cst_33 : f32 to vector<1x128xf32>
    %68 = arith.addf %67, %66 : vector<1x128xf32>
    %69 = arith.divf %67, %68 : vector<1x128xf32>
    %70 = vector.extract_strided_slice %53 {offsets = [0, 256], sizes = [1, 128], strides = [1, 1]} : vector<1x384xf32> to vector<1x128xf32>
    %71 = vector.extract_strided_slice %51 {offsets = [0, 256], sizes = [1, 128], strides = [1, 1]} : vector<1x384xf32> to vector<1x128xf32>
    %72 = arith.addf %71, %13 : vector<1x128xf32>
    %73 = arith.mulf %61, %72 : vector<1x128xf32>
    %74 = arith.addf %70, %73 : vector<1x128xf32>
    %75 = math.tanh %74 : vector<1x128xf32>
    %cst_34 = arith.constant 1.000000e+00 : f32
    %76 = vector.broadcast %cst_34 : f32 to vector<1x128xf32>
    %77 = arith.subf %76, %69 : vector<1x128xf32>
    %78 = arith.mulf %77, %75 : vector<1x128xf32>
    %79 = arith.mulf %69, %46 : vector<1x128xf32>
    %80 = arith.addf %78, %79 : vector<1x128xf32>
    %81 = arith.index_cast %c1_i32_27 : i32 to index
    %c0_35 = arith.constant 0 : index
    %82 = vector.load %arg13[%81, %c0_35] : memref<8x128xf32, #tpu.memory_space<vmem>>, vector<1x128xf32>
    tpu.vector_store %arg13[%81, %c0_35], %80 {strides = array<i32>} : memref<8x128xf32, #tpu.memory_space<vmem>>, vector<1x128xf32>,
    %c2_i32 = arith.constant 2 : i32
    %83 = arith.truncf %80 : vector<1x128xf32> to vector<1x128xbf16>
    %c0_36 = arith.constant 0 : index
    %c0_37 = arith.constant 0 : index
    %84 = vector.load %arg4[%c0_36, %c0_37] : memref<128x384xbf16, #tpu.memory_space<vmem>>, vector<128x384xbf16>
    %cst_38 = arith.constant dense<0.000000e+00> : vector<1x384xf32>
    %85 = tpu.matmul %83, %84, %cst_38 {dimension_numbers = #tpu.dot_dimension_numbers<[1], [0], [0], [1], [0, 0, 1, 1], [], []>} : vector<1x128xbf16>, vector<128x384xbf16>, vector<1x384xf32> -> vector<1x384xf32>
    %86 = arith.index_cast %c2_i32 : i32 to index
    %c0_39 = arith.constant 0 : index
    %87 = vector.load %arg12[%86, %c0_39] : memref<8x384xf32, #tpu.memory_space<vmem>>, vector<1x384xf32>
    %88 = vector.extract_strided_slice %87 {offsets = [0, 0], sizes = [1, 128], strides = [1, 1]} : vector<1x384xf32> to vector<1x128xf32>
    %89 = vector.extract_strided_slice %85 {offsets = [0, 0], sizes = [1, 128], strides = [1, 1]} : vector<1x384xf32> to vector<1x128xf32>
    %90 = arith.addf %88, %89 : vector<1x128xf32>
    %91 = arith.negf %90 : vector<1x128xf32>
    %92 = math.exp %91 : vector<1x128xf32>
    %cst_40 = arith.constant 1.000000e+00 : f32
    %93 = vector.broadcast %cst_40 : f32 to vector<1x128xf32>
    %94 = arith.addf %93, %92 : vector<1x128xf32>
    %95 = arith.divf %93, %94 : vector<1x128xf32>
    %96 = vector.extract_strided_slice %87 {offsets = [0, 128], sizes = [1, 128], strides = [1, 1]} : vector<1x384xf32> to vector<1x128xf32>
    %97 = vector.extract_strided_slice %85 {offsets = [0, 128], sizes = [1, 128], strides = [1, 1]} : vector<1x384xf32> to vector<1x128xf32>
    %98 = arith.addf %96, %97 : vector<1x128xf32>
    %99 = arith.negf %98 : vector<1x128xf32>
    %100 = math.exp %99 : vector<1x128xf32>
    %cst_41 = arith.constant 1.000000e+00 : f32
    %101 = vector.broadcast %cst_41 : f32 to vector<1x128xf32>
    %102 = arith.addf %101, %100 : vector<1x128xf32>
    %103 = arith.divf %101, %102 : vector<1x128xf32>
    %104 = vector.extract_strided_slice %87 {offsets = [0, 256], sizes = [1, 128], strides = [1, 1]} : vector<1x384xf32> to vector<1x128xf32>
    %105 = vector.extract_strided_slice %85 {offsets = [0, 256], sizes = [1, 128], strides = [1, 1]} : vector<1x384xf32> to vector<1x128xf32>
    %106 = arith.addf %105, %13 : vector<1x128xf32>
    %107 = arith.mulf %95, %106 : vector<1x128xf32>
    %108 = arith.addf %104, %107 : vector<1x128xf32>
    %109 = math.tanh %108 : vector<1x128xf32>
    %cst_42 = arith.constant 1.000000e+00 : f32
    %110 = vector.broadcast %cst_42 : f32 to vector<1x128xf32>
    %111 = arith.subf %110, %103 : vector<1x128xf32>
    %112 = arith.mulf %111, %109 : vector<1x128xf32>
    %113 = arith.mulf %103, %80 : vector<1x128xf32>
    %114 = arith.addf %112, %113 : vector<1x128xf32>
    %115 = arith.index_cast %c2_i32 : i32 to index
    %c0_43 = arith.constant 0 : index
    %116 = vector.load %arg13[%115, %c0_43] : memref<8x128xf32, #tpu.memory_space<vmem>>, vector<1x128xf32>
    tpu.vector_store %arg13[%115, %c0_43], %114 {strides = array<i32>} : memref<8x128xf32, #tpu.memory_space<vmem>>, vector<1x128xf32>,
    %c3_i32 = arith.constant 3 : i32
    %117 = arith.truncf %114 : vector<1x128xf32> to vector<1x128xbf16>
    %c0_44 = arith.constant 0 : index
    %c0_45 = arith.constant 0 : index
    %118 = vector.load %arg4[%c0_44, %c0_45] : memref<128x384xbf16, #tpu.memory_space<vmem>>, vector<128x384xbf16>
    %cst_46 = arith.constant dense<0.000000e+00> : vector<1x384xf32>
    %119 = tpu.matmul %117, %118, %cst_46 {dimension_numbers = #tpu.dot_dimension_numbers<[1], [0], [0], [1], [0, 0, 1, 1], [], []>} : vector<1x128xbf16>, vector<128x384xbf16>, vector<1x384xf32> -> vector<1x384xf32>
    %120 = arith.index_cast %c3_i32 : i32 to index
    %c0_47 = arith.constant 0 : index
    %121 = vector.load %arg12[%120, %c0_47] : memref<8x384xf32, #tpu.memory_space<vmem>>, vector<1x384xf32>
    %122 = vector.extract_strided_slice %121 {offsets = [0, 0], sizes = [1, 128], strides = [1, 1]} : vector<1x384xf32> to vector<1x128xf32>
    %123 = vector.extract_strided_slice %119 {offsets = [0, 0], sizes = [1, 128], strides = [1, 1]} : vector<1x384xf32> to vector<1x128xf32>
    %124 = arith.addf %122, %123 : vector<1x128xf32>
    %125 = arith.negf %124 : vector<1x128xf32>
    %126 = math.exp %125 : vector<1x128xf32>
    %cst_48 = arith.constant 1.000000e+00 : f32
    %127 = vector.broadcast %cst_48 : f32 to vector<1x128xf32>
    %128 = arith.addf %127, %126 : vector<1x128xf32>
    %129 = arith.divf %127, %128 : vector<1x128xf32>
    %130 = vector.extract_strided_slice %121 {offsets = [0, 128], sizes = [1, 128], strides = [1, 1]} : vector<1x384xf32> to vector<1x128xf32>
    %131 = vector.extract_strided_slice %119 {offsets = [0, 128], sizes = [1, 128], strides = [1, 1]} : vector<1x384xf32> to vector<1x128xf32>
    %132 = arith.addf %130, %131 : vector<1x128xf32>
    %133 = arith.negf %132 : vector<1x128xf32>
    %134 = math.exp %133 : vector<1x128xf32>
    %cst_49 = arith.constant 1.000000e+00 : f32
    %135 = vector.broadcast %cst_49 : f32 to vector<1x128xf32>
    %136 = arith.addf %135, %134 : vector<1x128xf32>
    %137 = arith.divf %135, %136 : vector<1x128xf32>
    %138 = vector.extract_strided_slice %121 {offsets = [0, 256], sizes = [1, 128], strides = [1, 1]} : vector<1x384xf32> to vector<1x128xf32>
    %139 = vector.extract_strided_slice %119 {offsets = [0, 256], sizes = [1, 128], strides = [1, 1]} : vector<1x384xf32> to vector<1x128xf32>
    %140 = arith.addf %139, %13 : vector<1x128xf32>
    %141 = arith.mulf %129, %140 : vector<1x128xf32>
    %142 = arith.addf %138, %141 : vector<1x128xf32>
    %143 = math.tanh %142 : vector<1x128xf32>
    %cst_50 = arith.constant 1.000000e+00 : f32
    %144 = vector.broadcast %cst_50 : f32 to vector<1x128xf32>
    %145 = arith.subf %144, %137 : vector<1x128xf32>
    %146 = arith.mulf %145, %143 : vector<1x128xf32>
    %147 = arith.mulf %137, %114 : vector<1x128xf32>
    %148 = arith.addf %146, %147 : vector<1x128xf32>
    %149 = arith.index_cast %c3_i32 : i32 to index
    %c0_51 = arith.constant 0 : index
    %150 = vector.load %arg13[%149, %c0_51] : memref<8x128xf32, #tpu.memory_space<vmem>>, vector<1x128xf32>
    tpu.vector_store %arg13[%149, %c0_51], %148 {strides = array<i32>} : memref<8x128xf32, #tpu.memory_space<vmem>>, vector<1x128xf32>,
    %c4_i32 = arith.constant 4 : i32
    %151 = arith.truncf %148 : vector<1x128xf32> to vector<1x128xbf16>
    %c0_52 = arith.constant 0 : index
    %c0_53 = arith.constant 0 : index
    %152 = vector.load %arg4[%c0_52, %c0_53] : memref<128x384xbf16, #tpu.memory_space<vmem>>, vector<128x384xbf16>
    %cst_54 = arith.constant dense<0.000000e+00> : vector<1x384xf32>
    %153 = tpu.matmul %151, %152, %cst_54 {dimension_numbers = #tpu.dot_dimension_numbers<[1], [0], [0], [1], [0, 0, 1, 1], [], []>} : vector<1x128xbf16>, vector<128x384xbf16>, vector<1x384xf32> -> vector<1x384xf32>
    %154 = arith.index_cast %c4_i32 : i32 to index
    %c0_55 = arith.constant 0 : index
    %155 = vector.load %arg12[%154, %c0_55] : memref<8x384xf32, #tpu.memory_space<vmem>>, vector<1x384xf32>
    %156 = vector.extract_strided_slice %155 {offsets = [0, 0], sizes = [1, 128], strides = [1, 1]} : vector<1x384xf32> to vector<1x128xf32>
    %157 = vector.extract_strided_slice %153 {offsets = [0, 0], sizes = [1, 128], strides = [1, 1]} : vector<1x384xf32> to vector<1x128xf32>
    %158 = arith.addf %156, %157 : vector<1x128xf32>
    %159 = arith.negf %158 : vector<1x128xf32>
    %160 = math.exp %159 : vector<1x128xf32>
    %cst_56 = arith.constant 1.000000e+00 : f32
    %161 = vector.broadcast %cst_56 : f32 to vector<1x128xf32>
    %162 = arith.addf %161, %160 : vector<1x128xf32>
    %163 = arith.divf %161, %162 : vector<1x128xf32>
    %164 = vector.extract_strided_slice %155 {offsets = [0, 128], sizes = [1, 128], strides = [1, 1]} : vector<1x384xf32> to vector<1x128xf32>
    %165 = vector.extract_strided_slice %153 {offsets = [0, 128], sizes = [1, 128], strides = [1, 1]} : vector<1x384xf32> to vector<1x128xf32>
    %166 = arith.addf %164, %165 : vector<1x128xf32>
    %167 = arith.negf %166 : vector<1x128xf32>
    %168 = math.exp %167 : vector<1x128xf32>
    %cst_57 = arith.constant 1.000000e+00 : f32
    %169 = vector.broadcast %cst_57 : f32 to vector<1x128xf32>
    %170 = arith.addf %169, %168 : vector<1x128xf32>
    %171 = arith.divf %169, %170 : vector<1x128xf32>
    %172 = vector.extract_strided_slice %155 {offsets = [0, 256], sizes = [1, 128], strides = [1, 1]} : vector<1x384xf32> to vector<1x128xf32>
    %173 = vector.extract_strided_slice %153 {offsets = [0, 256], sizes = [1, 128], strides = [1, 1]} : vector<1x384xf32> to vector<1x128xf32>
    %174 = arith.addf %173, %13 : vector<1x128xf32>
    %175 = arith.mulf %163, %174 : vector<1x128xf32>
    %176 = arith.addf %172, %175 : vector<1x128xf32>
    %177 = math.tanh %176 : vector<1x128xf32>
    %cst_58 = arith.constant 1.000000e+00 : f32
    %178 = vector.broadcast %cst_58 : f32 to vector<1x128xf32>
    %179 = arith.subf %178, %171 : vector<1x128xf32>
    %180 = arith.mulf %179, %177 : vector<1x128xf32>
    %181 = arith.mulf %171, %148 : vector<1x128xf32>
    %182 = arith.addf %180, %181 : vector<1x128xf32>
    %183 = arith.index_cast %c4_i32 : i32 to index
    %c0_59 = arith.constant 0 : index
    %184 = vector.load %arg13[%183, %c0_59] : memref<8x128xf32, #tpu.memory_space<vmem>>, vector<1x128xf32>
    tpu.vector_store %arg13[%183, %c0_59], %182 {strides = array<i32>} : memref<8x128xf32, #tpu.memory_space<vmem>>, vector<1x128xf32>,
    %c5_i32 = arith.constant 5 : i32
    %185 = arith.truncf %182 : vector<1x128xf32> to vector<1x128xbf16>
    %c0_60 = arith.constant 0 : index
    %c0_61 = arith.constant 0 : index
    %186 = vector.load %arg4[%c0_60, %c0_61] : memref<128x384xbf16, #tpu.memory_space<vmem>>, vector<128x384xbf16>
    %cst_62 = arith.constant dense<0.000000e+00> : vector<1x384xf32>
    %187 = tpu.matmul %185, %186, %cst_62 {dimension_numbers = #tpu.dot_dimension_numbers<[1], [0], [0], [1], [0, 0, 1, 1], [], []>} : vector<1x128xbf16>, vector<128x384xbf16>, vector<1x384xf32> -> vector<1x384xf32>
    %188 = arith.index_cast %c5_i32 : i32 to index
    %c0_63 = arith.constant 0 : index
    %189 = vector.load %arg12[%188, %c0_63] : memref<8x384xf32, #tpu.memory_space<vmem>>, vector<1x384xf32>
    %190 = vector.extract_strided_slice %189 {offsets = [0, 0], sizes = [1, 128], strides = [1, 1]} : vector<1x384xf32> to vector<1x128xf32>
    %191 = vector.extract_strided_slice %187 {offsets = [0, 0], sizes = [1, 128], strides = [1, 1]} : vector<1x384xf32> to vector<1x128xf32>
    %192 = arith.addf %190, %191 : vector<1x128xf32>
    %193 = arith.negf %192 : vector<1x128xf32>
    %194 = math.exp %193 : vector<1x128xf32>
    %cst_64 = arith.constant 1.000000e+00 : f32
    %195 = vector.broadcast %cst_64 : f32 to vector<1x128xf32>
    %196 = arith.addf %195, %194 : vector<1x128xf32>
    %197 = arith.divf %195, %196 : vector<1x128xf32>
    %198 = vector.extract_strided_slice %189 {offsets = [0, 128], sizes = [1, 128], strides = [1, 1]} : vector<1x384xf32> to vector<1x128xf32>
    %199 = vector.extract_strided_slice %187 {offsets = [0, 128], sizes = [1, 128], strides = [1, 1]} : vector<1x384xf32> to vector<1x128xf32>
    %200 = arith.addf %198, %199 : vector<1x128xf32>
    %201 = arith.negf %200 : vector<1x128xf32>
    %202 = math.exp %201 : vector<1x128xf32>
    %cst_65 = arith.constant 1.000000e+00 : f32
    %203 = vector.broadcast %cst_65 : f32 to vector<1x128xf32>
    %204 = arith.addf %203, %202 : vector<1x128xf32>
    %205 = arith.divf %203, %204 : vector<1x128xf32>
    %206 = vector.extract_strided_slice %189 {offsets = [0, 256], sizes = [1, 128], strides = [1, 1]} : vector<1x384xf32> to vector<1x128xf32>
    %207 = vector.extract_strided_slice %187 {offsets = [0, 256], sizes = [1, 128], strides = [1, 1]} : vector<1x384xf32> to vector<1x128xf32>
    %208 = arith.addf %207, %13 : vector<1x128xf32>
    %209 = arith.mulf %197, %208 : vector<1x128xf32>
    %210 = arith.addf %206, %209 : vector<1x128xf32>
    %211 = math.tanh %210 : vector<1x128xf32>
    %cst_66 = arith.constant 1.000000e+00 : f32
    %212 = vector.broadcast %cst_66 : f32 to vector<1x128xf32>
    %213 = arith.subf %212, %205 : vector<1x128xf32>
    %214 = arith.mulf %213, %211 : vector<1x128xf32>
    %215 = arith.mulf %205, %182 : vector<1x128xf32>
    %216 = arith.addf %214, %215 : vector<1x128xf32>
    %217 = arith.index_cast %c5_i32 : i32 to index
    %c0_67 = arith.constant 0 : index
    %218 = vector.load %arg13[%217, %c0_67] : memref<8x128xf32, #tpu.memory_space<vmem>>, vector<1x128xf32>
    tpu.vector_store %arg13[%217, %c0_67], %216 {strides = array<i32>} : memref<8x128xf32, #tpu.memory_space<vmem>>, vector<1x128xf32>,
    %c6_i32 = arith.constant 6 : i32
    %219 = arith.truncf %216 : vector<1x128xf32> to vector<1x128xbf16>
    %c0_68 = arith.constant 0 : index
    %c0_69 = arith.constant 0 : index
    %220 = vector.load %arg4[%c0_68, %c0_69] : memref<128x384xbf16, #tpu.memory_space<vmem>>, vector<128x384xbf16>
    %cst_70 = arith.constant dense<0.000000e+00> : vector<1x384xf32>
    %221 = tpu.matmul %219, %220, %cst_70 {dimension_numbers = #tpu.dot_dimension_numbers<[1], [0], [0], [1], [0, 0, 1, 1], [], []>} : vector<1x128xbf16>, vector<128x384xbf16>, vector<1x384xf32> -> vector<1x384xf32>
    %222 = arith.index_cast %c6_i32 : i32 to index
    %c0_71 = arith.constant 0 : index
    %223 = vector.load %arg12[%222, %c0_71] : memref<8x384xf32, #tpu.memory_space<vmem>>, vector<1x384xf32>
    %224 = vector.extract_strided_slice %223 {offsets = [0, 0], sizes = [1, 128], strides = [1, 1]} : vector<1x384xf32> to vector<1x128xf32>
    %225 = vector.extract_strided_slice %221 {offsets = [0, 0], sizes = [1, 128], strides = [1, 1]} : vector<1x384xf32> to vector<1x128xf32>
    %226 = arith.addf %224, %225 : vector<1x128xf32>
    %227 = arith.negf %226 : vector<1x128xf32>
    %228 = math.exp %227 : vector<1x128xf32>
    %cst_72 = arith.constant 1.000000e+00 : f32
    %229 = vector.broadcast %cst_72 : f32 to vector<1x128xf32>
    %230 = arith.addf %229, %228 : vector<1x128xf32>
    %231 = arith.divf %229, %230 : vector<1x128xf32>
    %232 = vector.extract_strided_slice %223 {offsets = [0, 128], sizes = [1, 128], strides = [1, 1]} : vector<1x384xf32> to vector<1x128xf32>
    %233 = vector.extract_strided_slice %221 {offsets = [0, 128], sizes = [1, 128], strides = [1, 1]} : vector<1x384xf32> to vector<1x128xf32>
    %234 = arith.addf %232, %233 : vector<1x128xf32>
    %235 = arith.negf %234 : vector<1x128xf32>
    %236 = math.exp %235 : vector<1x128xf32>
    %cst_73 = arith.constant 1.000000e+00 : f32
    %237 = vector.broadcast %cst_73 : f32 to vector<1x128xf32>
    %238 = arith.addf %237, %236 : vector<1x128xf32>
    %239 = arith.divf %237, %238 : vector<1x128xf32>
    %240 = vector.extract_strided_slice %223 {offsets = [0, 256], sizes = [1, 128], strides = [1, 1]} : vector<1x384xf32> to vector<1x128xf32>
    %241 = vector.extract_strided_slice %221 {offsets = [0, 256], sizes = [1, 128], strides = [1, 1]} : vector<1x384xf32> to vector<1x128xf32>
    %242 = arith.addf %241, %13 : vector<1x128xf32>
    %243 = arith.mulf %231, %242 : vector<1x128xf32>
    %244 = arith.addf %240, %243 : vector<1x128xf32>
    %245 = math.tanh %244 : vector<1x128xf32>
    %cst_74 = arith.constant 1.000000e+00 : f32
    %246 = vector.broadcast %cst_74 : f32 to vector<1x128xf32>
    %247 = arith.subf %246, %239 : vector<1x128xf32>
    %248 = arith.mulf %247, %245 : vector<1x128xf32>
    %249 = arith.mulf %239, %216 : vector<1x128xf32>
    %250 = arith.addf %248, %249 : vector<1x128xf32>
    %251 = arith.index_cast %c6_i32 : i32 to index
    %c0_75 = arith.constant 0 : index
    %252 = vector.load %arg13[%251, %c0_75] : memref<8x128xf32, #tpu.memory_space<vmem>>, vector<1x128xf32>
    tpu.vector_store %arg13[%251, %c0_75], %250 {strides = array<i32>} : memref<8x128xf32, #tpu.memory_space<vmem>>, vector<1x128xf32>,
    %c7_i32 = arith.constant 7 : i32
    %253 = arith.truncf %250 : vector<1x128xf32> to vector<1x128xbf16>
    %c0_76 = arith.constant 0 : index
    %c0_77 = arith.constant 0 : index
    %254 = vector.load %arg4[%c0_76, %c0_77] : memref<128x384xbf16, #tpu.memory_space<vmem>>, vector<128x384xbf16>
    %cst_78 = arith.constant dense<0.000000e+00> : vector<1x384xf32>
    %255 = tpu.matmul %253, %254, %cst_78 {dimension_numbers = #tpu.dot_dimension_numbers<[1], [0], [0], [1], [0, 0, 1, 1], [], []>} : vector<1x128xbf16>, vector<128x384xbf16>, vector<1x384xf32> -> vector<1x384xf32>
    %256 = arith.index_cast %c7_i32 : i32 to index
    %c0_79 = arith.constant 0 : index
    %257 = vector.load %arg12[%256, %c0_79] : memref<8x384xf32, #tpu.memory_space<vmem>>, vector<1x384xf32>
    %258 = vector.extract_strided_slice %257 {offsets = [0, 0], sizes = [1, 128], strides = [1, 1]} : vector<1x384xf32> to vector<1x128xf32>
    %259 = vector.extract_strided_slice %255 {offsets = [0, 0], sizes = [1, 128], strides = [1, 1]} : vector<1x384xf32> to vector<1x128xf32>
    %260 = arith.addf %258, %259 : vector<1x128xf32>
    %261 = arith.negf %260 : vector<1x128xf32>
    %262 = math.exp %261 : vector<1x128xf32>
    %cst_80 = arith.constant 1.000000e+00 : f32
    %263 = vector.broadcast %cst_80 : f32 to vector<1x128xf32>
    %264 = arith.addf %263, %262 : vector<1x128xf32>
    %265 = arith.divf %263, %264 : vector<1x128xf32>
    %266 = vector.extract_strided_slice %257 {offsets = [0, 128], sizes = [1, 128], strides = [1, 1]} : vector<1x384xf32> to vector<1x128xf32>
    %267 = vector.extract_strided_slice %255 {offsets = [0, 128], sizes = [1, 128], strides = [1, 1]} : vector<1x384xf32> to vector<1x128xf32>
    %268 = arith.addf %266, %267 : vector<1x128xf32>
    %269 = arith.negf %268 : vector<1x128xf32>
    %270 = math.exp %269 : vector<1x128xf32>
    %cst_81 = arith.constant 1.000000e+00 : f32
    %271 = vector.broadcast %cst_81 : f32 to vector<1x128xf32>
    %272 = arith.addf %271, %270 : vector<1x128xf32>
    %273 = arith.divf %271, %272 : vector<1x128xf32>
    %274 = vector.extract_strided_slice %257 {offsets = [0, 256], sizes = [1, 128], strides = [1, 1]} : vector<1x384xf32> to vector<1x128xf32>
    %275 = vector.extract_strided_slice %255 {offsets = [0, 256], sizes = [1, 128], strides = [1, 1]} : vector<1x384xf32> to vector<1x128xf32>
    %276 = arith.addf %275, %13 : vector<1x128xf32>
    %277 = arith.mulf %265, %276 : vector<1x128xf32>
    %278 = arith.addf %274, %277 : vector<1x128xf32>
    %279 = math.tanh %278 : vector<1x128xf32>
    %cst_82 = arith.constant 1.000000e+00 : f32
    %280 = vector.broadcast %cst_82 : f32 to vector<1x128xf32>
    %281 = arith.subf %280, %273 : vector<1x128xf32>
    %282 = arith.mulf %281, %279 : vector<1x128xf32>
    %283 = arith.mulf %273, %250 : vector<1x128xf32>
    %284 = arith.addf %282, %283 : vector<1x128xf32>
    %285 = arith.index_cast %c7_i32 : i32 to index
    %c0_83 = arith.constant 0 : index
    %286 = vector.load %arg13[%285, %c0_83] : memref<8x128xf32, #tpu.memory_space<vmem>>, vector<1x128xf32>
    tpu.vector_store %arg13[%285, %c0_83], %284 {strides = array<i32>} : memref<8x128xf32, #tpu.memory_space<vmem>>, vector<1x128xf32>,
    %c8_i32_84 = arith.constant 8 : i32
    %c0_85 = arith.constant 0 : index
    %c0_86 = arith.constant 0 : index
    %287 = vector.load %arg10[%c0_85, %c0_86] : memref<1x128xf32, #tpu.memory_space<vmem>>, vector<1x128xf32>
    tpu.vector_store %arg10[%c0_85, %c0_86], %284 {strides = array<i32>} : memref<1x128xf32, #tpu.memory_space<vmem>>, vector<1x128xf32>,
    %c0_87 = arith.constant 0 : index
    %c0_88 = arith.constant 0 : index
    %288 = vector.load %arg13[%c0_87, %c0_88] : memref<8x128xf32, #tpu.memory_space<vmem>>, vector<8x128xf32>
    %289 = arith.truncf %288 : vector<8x128xf32> to vector<8x128xbf16>
    %c0_89 = arith.constant 0 : index
    %c0_90 = arith.constant 0 : index
    %290 = vector.load %arg7[%c0_89, %c0_90] : memref<128x128xbf16, #tpu.memory_space<vmem>>, vector<128x128xbf16>
    %cst_91 = arith.constant dense<0.000000e+00> : vector<8x128xf32>
    %291 = tpu.matmul %289, %290, %cst_91 {dimension_numbers = #tpu.dot_dimension_numbers<[1], [0], [0], [1], [0, 0, 1, 1], [], []>} : vector<8x128xbf16>, vector<128x128xbf16>, vector<8x128xf32> -> vector<8x128xf32>
    %c0_92 = arith.constant 0 : index
    %c0_93 = arith.constant 0 : index
    %292 = vector.load %arg8[%c0_92, %c0_93] : memref<1x128xf32, #tpu.memory_space<vmem>>, vector<1x128xf32>
    %293 = vector.broadcast %292 : vector<1x128xf32> to vector<8x128xf32>
    %294 = arith.addf %291, %293 : vector<8x128xf32>
    %c0_94 = arith.constant 0 : index
    %c0_95 = arith.constant 0 : index
    %295 = vector.load %arg9[%c0_94, %c0_95] : memref<8x128xf32, #tpu.memory_space<vmem>>, vector<8x128xf32>
    tpu.vector_store %arg9[%c0_94, %c0_95], %294 {strides = array<i32>} : memref<8x128xf32, #tpu.memory_space<vmem>>, vector<8x128xf32>,
    return
  }
}

</mosaic_0001>

<llo_original>
// kernel: tpu_custom_call.1
$region0: #{tpu_custom_call.1}
  #allocation0 [shape = 'u32[]', space=smem, size = 0x4, offset = 0x4, fixed_abs, tag = 'smem constant byte address 0x4 - core index']
  #allocation1 [shape = 'u32[144,128]{1,0:T(1,128)}', space=vmem, size = 0x12000, scoped, tag = 'internal scratch']
  #allocation2 [shape = 'f32[8,128]{1,0:T(8,128)}', space=vmem, size = 0x1000, scoped, tag = 'scratch operand']
  #allocation3 [shape = 'f32[8,384]{1,0:T(8,128)}', space=vmem, size = 0x3000, scoped, tag = 'scratch operand']
  #allocation4 [shape = 'f32[8,128]{1,0:T(8,128)}', space=vmem, size = 0x1000, scoped, tag = 'scratch operand']
  %s0 = inlined_call_operand.hbm [shape: s32[8], index: 0, kind: input, shape index: {}]
  %s1 = inlined_call_operand.vmem [shape: f32[1,128], index: 1, kind: input, shape index: {}]
  %s2 = inlined_call_operand.hbm [shape: f32[64,128], index: 2, kind: input, shape index: {}]
  %s3 = inlined_call_operand.hbm [shape: bf16[128,384], index: 3, kind: input, shape index: {}]
  %s4 = inlined_call_operand.hbm [shape: bf16[128,384], index: 4, kind: input, shape index: {}]
  %s5 = inlined_call_operand.vmem [shape: f32[1,384], index: 5, kind: input, shape index: {}]
  %s6 = inlined_call_operand.vmem [shape: f32[1,128], index: 6, kind: input, shape index: {}]
  %s7 = inlined_call_operand.hbm [shape: bf16[128,128], index: 7, kind: input, shape index: {}]
  %s8 = inlined_call_operand.vmem [shape: f32[1,128], index: 8, kind: input, shape index: {}]
  %s9 = inlined_call_operand.hbm [shape: f32[8,128], index: 9, kind: output, shape index: {0}]
  %s10 = inlined_call_operand.hbm [shape: f32[1,128], index: 10, kind: output, shape index: {1}]
  %11 = xla_tuple %s9, %s10
  %s12 = sld [smem:[#allocation0]]
  $region81: #{tpu_custom_call.1} parent=0
    _
  %s14 = ssub.s32 1, %s12
  %s15 = scalar_select 0, %s14, %s12
  $region1: #{tpu_custom_call.1} parent=0
    #allocation5 [shape = 'u8[512]{0}', space=smem, size = 0x200, scoped, tag = 'input window, operand 0, single buffered']
    #allocation6 [shape = 's32[1]{0}', space=sflag, size = 0x4, scoped, tag = 'scoped memory for tpu_custom_call.1']
    #allocation7 [shape = 's32[1]{0}', space=sflag, size = 0x4, scoped, tag = 'scoped memory for tpu_custom_call.1']
    #allocation8 [shape = 's32[1]{0}', space=sflag, size = 0x4, scoped, tag = 'scoped memory for tpu_custom_call.1']
    #allocation9 [shape = 'u8[32768]{0}', space=vmem, size = 0x8000, scoped, tag = 'input window, operand 2, single buffered']
    #allocation10 [shape = 'u8[98304]{0}', space=vmem, size = 0x18000, scoped, tag = 'input window, operand 3, single buffered']
    #allocation11 [shape = 's32[1]{0}', space=sflag, size = 0x4, scoped, tag = 'scoped memory for tpu_custom_call.1']
    #allocation12 [shape = 'u8[98304]{0}', space=vmem, size = 0x18000, scoped, tag = 'input window, operand 4, single buffered']
    #allocation13 [shape = 'u8[32768]{0}', space=vmem, size = 0x8000, scoped, tag = 'input window, operand 7, single buffered']
    #allocation14 [shape = 's32[1]{0}', space=sflag, size = 0x4, scoped, tag = 'scoped memory for tpu_custom_call.1']
    #allocation15 [shape = 'u8[4096]{0}', space=vmem, size = 0x1000, scoped, tag = 'output window, operand 0, single buffered']
    #allocation16 [shape = 'u8[512]{0}', space=vmem, size = 0x400, scoped, tag = 'output window, operand 1, single buffered']
    #allocation17 [shape = 's32[1]{0}', space=sflag, size = 0x4, scoped, tag = 'scoped memory for tpu_custom_call.1']
    %16 = vsyncpa [#allocation8], 0
    %17 = vsyncpa [#allocation6], 0
    %18 = vsyncpa [#allocation11], 0
    %19 = vsyncpa [#allocation14], 0
    %20 = vsyncpa [#allocation7], 0
    %21 = vsyncpa [#allocation17], 0
    // Predicated region
    $region2: #{tpu_custom_call.1} parent=1 // pred_check
      _
    $region3: #{tpu_custom_call.1} parent=1 // pred_check_branch
      %23 = sbr.rel (0) target = $region5
    $region4: #{tpu_custom_call.1} parent=1 // pred_region
      %s25 = ssub.s32 16, 16
      %26 = vsyncadd [#allocation8], %s25
      %29 = dma.hbm_to_smem %s0, 16, [#allocation5], [#allocation8]
    $region5: #{tpu_custom_call.1} parent=1 // pred_fallthru
      _
    // Predicated region
    $region6: #{tpu_custom_call.1} parent=1 // pred_check
      _
    $region7: #{tpu_custom_call.1} parent=1 // pred_check_branch
      %31 = sbr.rel (0) target = $region9
    $region8: #{tpu_custom_call.1} parent=1 // pred_region
      _
    $region9: #{tpu_custom_call.1} parent=1 // pred_fallthru
      _
    // Predicated region
    $region10: #{tpu_custom_call.1} parent=1 // pred_check
      _
    $region11: #{tpu_custom_call.1} parent=1 // pred_check_branch
      %33 = sbr.rel (0) target = $region13
    $region12: #{tpu_custom_call.1} parent=1 // pred_region
      %s35 = ssub.s32 1024, 1024
      %36 = vsyncadd [#allocation6], %s35
      %s37 = sshll.u32 [#allocation9], 4
      %s38 = int_to_ptr.vmem [resolvable:$true] %s37
      %43 = dma.hbm_to_vmem [thread:$0]  %s2, 1024, %s38, [#allocation6], 128, 128, 8
    $region13: #{tpu_custom_call.1} parent=1 // pred_fallthru
      _
    // Predicated region
    $region14: #{tpu_custom_call.1} parent=1 // pred_check
      _
    $region15: #{tpu_custom_call.1} parent=1 // pred_check_branch
      %45 = sbr.rel (0) target = $region17
    $region16: #{tpu_custom_call.1} parent=1 // pred_region
      %s47 = ssub.s32 3072, 3072
      %48 = vsyncadd [#allocation11], %s47
      %s49 = sshll.u32 [#allocation10], 4
      %s50 = int_to_ptr.vmem [resolvable:$true] %s49
      %55 = dma.hbm_to_vmem [thread:$0]  %s3, 3072, %s50, [#allocation11], 192, 192, 12
    $region17: #{tpu_custom_call.1} parent=1 // pred_fallthru
      _
    // Predicated region
    $region18: #{tpu_custom_call.1} parent=1 // pred_check
      _
    $region19: #{tpu_custom_call.1} parent=1 // pred_check_branch
      %57 = sbr.rel (0) target = $region21
    $region20: #{tpu_custom_call.1} parent=1 // pred_region
      %s59 = ssub.s32 3072, 3072
      %60 = vsyncadd [#allocation11], %s59
      %s61 = sshll.u32 [#allocation12], 4
      %s62 = int_to_ptr.vmem [resolvable:$true] %s61
      %67 = dma.hbm_to_vmem [thread:$0]  %s4, 3072, %s62, [#allocation11], 192, 192, 12
    $region21: #{tpu_custom_call.1} parent=1 // pred_fallthru
      _
    // Predicated region
    $region22: #{tpu_custom_call.1} parent=1 // pred_check
      _
    $region23: #{tpu_custom_call.1} parent=1 // pred_check_branch
      %69 = sbr.rel (0) target = $region25
    $region24: #{tpu_custom_call.1} parent=1 // pred_region
      _
    $region25: #{tpu_custom_call.1} parent=1 // pred_fallthru
      _
    // Predicated region
    $region26: #{tpu_custom_call.1} parent=1 // pred_check
      _
    $region27: #{tpu_custom_call.1} parent=1 // pred_check_branch
      %71 = sbr.rel (0) target = $region29
    $region28: #{tpu_custom_call.1} parent=1 // pred_region
      _
    $region29: #{tpu_custom_call.1} parent=1 // pred_fallthru
      _
    // Predicated region
    $region30: #{tpu_custom_call.1} parent=1 // pred_check
      _
    $region31: #{tpu_custom_call.1} parent=1 // pred_check_branch
      %73 = sbr.rel (0) target = $region33
    $region32: #{tpu_custom_call.1} parent=1 // pred_region
      %s75 = ssub.s32 1024, 1024
      %76 = vsyncadd [#allocation14], %s75
      %s77 = sshll.u32 [#allocation13], 4
      %s78 = int_to_ptr.vmem [resolvable:$true] %s77
      %83 = dma.hbm_to_vmem [thread:$0]  %s7, 1024, %s78, [#allocation14], 64, 64, 4
    $region33: #{tpu_custom_call.1} parent=1 // pred_fallthru
      _
    // Predicated region
    $region34: #{tpu_custom_call.1} parent=1 // pred_check
      _
    $region35: #{tpu_custom_call.1} parent=1 // pred_check_branch
      %85 = sbr.rel (0) target = $region37
    $region36: #{tpu_custom_call.1} parent=1 // pred_region
      _
    $region37: #{tpu_custom_call.1} parent=1 // pred_fallthru
      _
    // Predicated region
    $region38: #{tpu_custom_call.1} parent=1 // pred_check
      _
    $region39: #{tpu_custom_call.1} parent=1 // pred_check_branch
      %87 = sbr.rel (0) target = $region41
    $region40: #{tpu_custom_call.1} parent=1 // pred_region
      %88 = dma.done [#allocation8], 16
    $region41: #{tpu_custom_call.1} parent=1 // pred_fallthru
      _
    // Predicated region
    $region42: #{tpu_custom_call.1} parent=1 // pred_check
      _
    $region43: #{tpu_custom_call.1} parent=1 // pred_check_branch
      %90 = sbr.rel (0) target = $region45
    $region44: #{tpu_custom_call.1} parent=1 // pred_region
      %91 = dma.done [#allocation6], 1024
    $region45: #{tpu_custom_call.1} parent=1 // pred_fallthru
      _
    // Predicated region
    $region46: #{tpu_custom_call.1} parent=1 // pred_check
      _
    $region47: #{tpu_custom_call.1} parent=1 // pred_check_branch
      %93 = sbr.rel (0) target = $region49
    $region48: #{tpu_custom_call.1} parent=1 // pred_region
      %94 = dma.done [#allocation11], 3072
    $region49: #{tpu_custom_call.1} parent=1 // pred_fallthru
      _
    // Predicated region
    $region50: #{tpu_custom_call.1} parent=1 // pred_check
      _
    $region51: #{tpu_custom_call.1} parent=1 // pred_check_branch
      %96 = sbr.rel (0) target = $region53
    $region52: #{tpu_custom_call.1} parent=1 // pred_region
      %97 = dma.done [#allocation11], 3072
    $region53: #{tpu_custom_call.1} parent=1 // pred_fallthru
      _
    // Predicated region
    $region54: #{tpu_custom_call.1} parent=1 // pred_check
      _
    $region55: #{tpu_custom_call.1} parent=1 // pred_check_branch
      %99 = sbr.rel (0) target = $region57
    $region56: #{tpu_custom_call.1} parent=1 // pred_region
      %100 = dma.done [#allocation14], 1024
    $region57: #{tpu_custom_call.1} parent=1 // pred_fallthru
      _
    %101 = sfence
    %103 = vst [vmem:[#allocation2] sm:$0xff] 0.0
    %104 = vst [vmem:[#allocation4] sm:$0xff] 0.0
    loop: start=0, step=1, limit=8
    $region58: #{tpu_custom_call.1} parent=1 // loop_pre_header
      _
    $region59: #{tpu_custom_call.1} parent=1 // loop_header
      %s106 = sphi 0, %s110
      %p107 = scmp.ge.s32.totalorder %s106, 8
    $region60: #{tpu_custom_call.1} parent=1 // loop_header_branch
      %109 = sbr.rel (%p107) target = $region64
    $region61: #{tpu_custom_call.1} parent=1 // loop_body
      %s111 = sld [smem:[#allocation5 + %s106]]
      %s112 = scalar_lea.vmem [#allocation9], %s111
      %v113 = vld [vmem:[%s112] sm:$0x1]
      %s114 = scalar_lea.vmem [#allocation2], %s106
      %115 = vst [vmem:[%s114] sm:$0x1] %v113
    $region62: #{tpu_custom_call.1} parent=1 // loop_footer
      %s110 = sadd.s32 1, %s106
    $region63: #{tpu_custom_call.1} parent=1 // loop_footer_branch
      %105 = sbr.rel target = $region59
    $region64: #{tpu_custom_call.1} parent=1 // loop_exit
      _
    %v116 = vld [vmem:[#allocation2] sm:$0xff]
    %v117 = vpack.c.bf16 %v116, %v116
    %v118 = vld [vmem:[#allocation10] sm:$0xff]
    %v119 = vld [vmem:[#allocation10 + $0x8] sm:$0xf]
    %v120 = vld [vmem:[#allocation10 + $0xc] sm:$0xff]
    %v121 = vld [vmem:[#allocation10 + $0x14] sm:$0xf]
    %v122 = vld [vmem:[#allocation10 + $0x18] sm:$0xff]
    %v123 = vld [vmem:[#allocation10 + $0x20] sm:$0xf]
    %v124 = vld [vmem:[#allocation10 + $0x24] sm:$0xff]
    %v125 = vld [vmem:[#allocation10 + $0x2c] sm:$0xf]
    %v126 = vld [vmem:[#allocation10 + $0x30] sm:$0xff]
    %v127 = vld [vmem:[#allocation10 + $0x38] sm:$0xf]
    %v128 = vld [vmem:[#allocation10 + $0x3c] sm:$0xff]
    %v129 = vld [vmem:[#allocation10 + $0x44] sm:$0xf]
    %v130 = vld [vmem:[#allocation10 + $0x48] sm:$0xff]
    %v131 = vld [vmem:[#allocation10 + $0x50] sm:$0xf]
    %v132 = vld [vmem:[#allocation10 + $0x54] sm:$0xff]
    %v133 = vld [vmem:[#allocation10 + $0x5c] sm:$0xf]
    %v134 = vld [vmem:[#allocation10 + $0x60] sm:$0xff]
    %v135 = vld [vmem:[#allocation10 + $0x68] sm:$0xf]
    %v136 = vld [vmem:[#allocation10 + $0x6c] sm:$0xff]
    %v137 = vld [vmem:[#allocation10 + $0x74] sm:$0xf]
    %v138 = vld [vmem:[#allocation10 + $0x78] sm:$0xff]
    %v139 = vld [vmem:[#allocation10 + $0x80] sm:$0xf]
    %v140 = vld [vmem:[#allocation10 + $0x84] sm:$0xff]
    %v141 = vld [vmem:[#allocation10 + $0x8c] sm:$0xf]
    %v142 = vld [vmem:[#allocation10 + $0x90] sm:$0xff]
    %v143 = vld [vmem:[#allocation10 + $0x98] sm:$0xf]
    %v144 = vld [vmem:[#allocation10 + $0x9c] sm:$0xff]
    %v145 = vld [vmem:[#allocation10 + $0xa4] sm:$0xf]
    %v146 = vld [vmem:[#allocation10 + $0xa8] sm:$0xff]
    %v147 = vld [vmem:[#allocation10 + $0xb0] sm:$0xf]
    %v148 = vld [vmem:[#allocation10 + $0xb4] sm:$0xff]
    %v149 = vld [vmem:[#allocation10 + $0xbc] sm:$0xf]
    %v150 = vld [vmem:[%s5] sm:$0x7]
    %v152 = vlaneseq
    %v153 = vshrl.u32 %v152, 7
    %v154 = vsub.s32 0, %v153
    %v155 = vrot.slane %v150, %v154
    %v156 = vlaneseq
    %v157 = vshrl.u32 %v156, 7
    %v158 = vsub.s32 1, %v157
    %v159 = vrot.slane %v150, %v158
    %v160 = vlaneseq
    %v161 = vshrl.u32 %v160, 7
    %v162 = vsub.s32 2, %v161
    %v163 = vrot.slane %v150, %v162
    %v199 = vunpack.c.l.b16 %v118
    %v200 = vunpack.c.h.b16 %v118
    %v201 = vunpack.c.l.b16 %v119
    %v202 = vunpack.c.l.b16 %v120
    %v203 = vunpack.c.h.b16 %v120
    %v204 = vunpack.c.l.b16 %v121
    %v205 = vunpack.c.l.b16 %v122
    %v206 = vunpack.c.h.b16 %v122
    %v207 = vunpack.c.l.b16 %v123
    %v208 = vunpack.c.l.b16 %v124
    %v209 = vunpack.c.h.b16 %v124
    %v210 = vunpack.c.l.b16 %v125
    %v211 = vunpack.c.l.b16 %v126
    %v212 = vunpack.c.h.b16 %v126
    %v213 = vunpack.c.l.b16 %v127
    %v214 = vunpack.c.l.b16 %v128
    %v215 = vunpack.c.h.b16 %v128
    %v216 = vunpack.c.l.b16 %v129
    %v217 = vunpack.c.l.b16 %v130
    %v218 = vunpack.c.h.b16 %v130
    %v219 = vunpack.c.l.b16 %v131
    %v220 = vunpack.c.l.b16 %v132
    %v221 = vunpack.c.h.b16 %v132
    %v222 = vunpack.c.l.b16 %v133
    %v223 = vunpack.c.l.b16 %v134
    %v224 = vunpack.c.h.b16 %v134
    %v225 = vunpack.c.l.b16 %v135
    %v226 = vunpack.c.l.b16 %v136
    %v227 = vunpack.c.h.b16 %v136
    %v228 = vunpack.c.l.b16 %v137
    %v229 = vunpack.c.l.b16 %v138
    %v230 = vunpack.c.h.b16 %v138
    %v231 = vunpack.c.l.b16 %v139
    %v232 = vunpack.c.l.b16 %v140
    %v233 = vunpack.c.h.b16 %v140
    %v234 = vunpack.c.l.b16 %v141
    %v235 = vunpack.c.l.b16 %v142
    %v236 = vunpack.c.h.b16 %v142
    %v237 = vunpack.c.l.b16 %v143
    %v238 = vunpack.c.l.b16 %v144
    %v239 = vunpack.c.h.b16 %v144
    %v240 = vunpack.c.l.b16 %v145
    %v241 = vunpack.c.l.b16 %v146
    %v242 = vunpack.c.h.b16 %v146
    %v243 = vunpack.c.l.b16 %v147
    %v244 = vunpack.c.l.b16 %v148
    %v245 = vunpack.c.h.b16 %v148
    %v246 = vunpack.c.l.b16 %v149
    %v247 = vpack.c.b16 %v202, %v199
    %v248 = vpack.c.b16 %v203, %v200
    %v249 = vpack.c.b16 %v204, %v201
    %v250 = vpack.c.b16 %v208, %v205
    %v251 = vpack.c.b16 %v209, %v206
    %v252 = vpack.c.b16 %v210, %v207
    %v253 = vpack.c.b16 %v214, %v211
    %v254 = vpack.c.b16 %v215, %v212
    %v255 = vpack.c.b16 %v216, %v213
    %v256 = vpack.c.b16 %v220, %v217
    %v257 = vpack.c.b16 %v221, %v218
    %v258 = vpack.c.b16 %v222, %v219
    %v259 = vpack.c.b16 %v226, %v223
    %v260 = vpack.c.b16 %v227, %v224
    %v261 = vpack.c.b16 %v228, %v225
    %v262 = vpack.c.b16 %v232, %v229
    %v263 = vpack.c.b16 %v233, %v230
    %v264 = vpack.c.b16 %v234, %v231
    %v265 = vpack.c.b16 %v238, %v235
    %v266 = vpack.c.b16 %v239, %v236
    %v267 = vpack.c.b16 %v240, %v237
    %v268 = vpack.c.b16 %v244, %v241
    %v269 = vpack.c.b16 %v245, %v242
    %v270 = vpack.c.b16 %v246, %v243
    %295 = vmatprep.subr.bf16.mxu0 %v248
    %296 = vmatpush1.bf16.msra.mxu0 %v247
    %297 = vmatprep.subr.bf16.mxu0 %v251
    %298 = vmatpush1.bf16.msra.mxu0 %v250
    %299 = vmatprep.subr.bf16.mxu0 %v254
    %300 = vmatpush1.bf16.msra.mxu0 %v253
    %301 = vmatprep.subr.bf16.mxu0 %v257
    %302 = vmatpush1.bf16.msra.mxu0 %v256
    %303 = vmatprep.subr.bf16.mxu0 %v260
    %304 = vmatpush1.bf16.msra.mxu0 %v259
    %305 = vmatprep.subr.bf16.mxu0 %v263
    %306 = vmatpush1.bf16.msra.mxu0 %v262
    %307 = vmatprep.subr.bf16.mxu0 %v266
    %308 = vmatpush1.bf16.msra.mxu0 %v265
    %309 = vmatprep.subr.bf16.mxu0 %v269
    %310 = vmatpush1.bf16.msra.mxu0 %v268
    %311 = vmatprep.subr.bf16.mxu0 0
    %312 = vmatpush1.bf16.msra.mxu0 0
    %313 = vmatprep.subr.bf16.mxu0 0
    %314 = vmatpush1.bf16.msra.mxu0 0
    %315 = vmatprep.subr.bf16.mxu0 0
    %316 = vmatpush1.bf16.msra.mxu0 0
    %317 = vmatprep.subr.bf16.mxu0 0
    %318 = vmatpush1.bf16.msra.mxu0 0
    %319 = vmatprep.subr.bf16.mxu0 0
    %320 = vmatpush1.bf16.msra.mxu0 0
    %321 = vmatprep.subr.bf16.mxu0 0
    %322 = vmatpush1.bf16.msra.mxu0 0
    %323 = vmatprep.subr.bf16.mxu0 0
    %324 = vmatpush1.bf16.msra.mxu0 0
    %325 = vmatprep.subr.bf16.mxu0 0
    %326 = vmatpush1.bf16.msra.mxu0 0
    %327 = vmatprep.mubr.bf16.mxu0 0
    %328 = vmatmul.mubr.bf16.gmra.mrb[0].mxu0 %v117
    %v329 = vpop.f32.mrb[0].mxu0
    %v330 = vadd.f32 %v155, %v329
    %v331 = vpop.f32.mrb[0].mxu0
    %v332 = vadd.f32 %v159, %v331
    %v333 = vpop.f32.mrb[0].mxu0
    %v334 = vpop.f32.mrb[0].mxu0
    %335 = vdwg.mxu0
    %336 = vmatprep.subr.bf16.mxu0 0
    %337 = vmatpush1.bf16.msra.mxu0 %v249
    %338 = vmatprep.subr.bf16.mxu0 0
    %339 = vmatpush1.bf16.msra.mxu0 %v252
    %340 = vmatprep.subr.bf16.mxu0 0
    %341 = vmatpush1.bf16.msra.mxu0 %v255
    %342 = vmatprep.subr.bf16.mxu0 0
    %343 = vmatpush1.bf16.msra.mxu0 %v258
    %344 = vmatprep.subr.bf16.mxu0 0
    %345 = vmatpush1.bf16.msra.mxu0 %v261
    %346 = vmatprep.subr.bf16.mxu0 0
    %347 = vmatpush1.bf16.msra.mxu0 %v264
    %348 = vmatprep.subr.bf16.mxu0 0
    %349 = vmatpush1.bf16.msra.mxu0 %v267
    %350 = vmatprep.subr.bf16.mxu0 0
    %351 = vmatpush1.bf16.msra.mxu0 %v270
    %352 = vmatprep.subr.bf16.mxu0 0
    %353 = vmatpush1.bf16.msra.mxu0 0
    %354 = vmatprep.subr.bf16.mxu0 0
    %355 = vmatpush1.bf16.msra.mxu0 0
    %356 = vmatprep.subr.bf16.mxu0 0
    %357 = vmatpush1.bf16.msra.mxu0 0
    %358 = vmatprep.subr.bf16.mxu0 0
    %359 = vmatpush1.bf16.msra.mxu0 0
    %360 = vmatprep.subr.bf16.mxu0 0
    %361 = vmatpush1.bf16.msra.mxu0 0
    %362 = vmatprep.subr.bf16.mxu0 0
    %363 = vmatpush1.bf16.msra.mxu0 0
    %364 = vmatprep.subr.bf16.mxu0 0
    %365 = vmatpush1.bf16.msra.mxu0 0
    %366 = vmatprep.subr.bf16.mxu0 0
    %367 = vmatpush1.bf16.msra.mxu0 0
    %368 = vmatprep.mubr.bf16.mxu0 0
    %369 = vmatmul.mubr.bf16.gmra.mrb[0].mxu0 %v117
    %v370 = vpop.f32.mrb[0].mxu0
    %v371 = vadd.f32 %v163, %v370
    %v372 = vpop.f32.mrb[0].mxu0
    %v373 = vpop.f32.mrb[0].mxu0
    %v374 = vpop.f32.mrb[0].mxu0
    %375 = vdwg.mxu0
    %376 = vst [vmem:[#allocation3] sm:$0xff] %v330
    %377 = vst [vmem:[#allocation3 + $0x8] sm:$0xff] %v332
    %378 = vst [vmem:[#allocation3 + $0x10] sm:$0xff] %v371
    %v379 = vld [vmem:[%s6] sm:$0x1]
    %v380 = vld [vmem:[%s1] sm:$0x1]
    %v381 = vpack.c.bf16 %v380, %v380
    %v382 = vld [vmem:[#allocation12] sm:$0xff]
    %v383 = vld [vmem:[#allocation12 + $0x8] sm:$0xf]
    %v384 = vld [vmem:[#allocation12 + $0xc] sm:$0xff]
    %v385 = vld [vmem:[#allocation12 + $0x14] sm:$0xf]
    %v386 = vld [vmem:[#allocation12 + $0x18] sm:$0xff]
    %v387 = vld [vmem:[#allocation12 + $0x20] sm:$0xf]
    %v388 = vld [vmem:[#allocation12 + $0x24] sm:$0xff]
    %v389 = vld [vmem:[#allocation12 + $0x2c] sm:$0xf]
    %v390 = vld [vmem:[#allocation12 + $0x30] sm:$0xff]
    %v391 = vld [vmem:[#allocation12 + $0x38] sm:$0xf]
    %v392 = vld [vmem:[#allocation12 + $0x3c] sm:$0xff]
    %v393 = vld [vmem:[#allocation12 + $0x44] sm:$0xf]
    %v394 = vld [vmem:[#allocation12 + $0x48] sm:$0xff]
    %v395 = vld [vmem:[#allocation12 + $0x50] sm:$0xf]
    %v396 = vld [vmem:[#allocation12 + $0x54] sm:$0xff]
    %v397 = vld [vmem:[#allocation12 + $0x5c] sm:$0xf]
    %v398 = vld [vmem:[#allocation12 + $0x60] sm:$0xff]
    %v399 = vld [vmem:[#allocation12 + $0x68] sm:$0xf]
    %v400 = vld [vmem:[#allocation12 + $0x6c] sm:$0xff]
    %v401 = vld [vmem:[#allocation12 + $0x74] sm:$0xf]
    %v402 = vld [vmem:[#allocation12 + $0x78] sm:$0xff]
    %v403 = vld [vmem:[#allocation12 + $0x80] sm:$0xf]
    %v404 = vld [vmem:[#allocation12 + $0x84] sm:$0xff]
    %v405 = vld [vmem:[#allocation12 + $0x8c] sm:$0xf]
    %v406 = vld [vmem:[#allocation12 + $0x90] sm:$0xff]
    %v407 = vld [vmem:[#allocation12 + $0x98] sm:$0xf]
    %v408 = vld [vmem:[#allocation12 + $0x9c] sm:$0xff]
    %v409 = vld [vmem:[#allocation12 + $0xa4] sm:$0xf]
    %v410 = vld [vmem:[#allocation12 + $0xa8] sm:$0xff]
    %v411 = vld [vmem:[#allocation12 + $0xb0] sm:$0xf]
    %v412 = vld [vmem:[#allocation12 + $0xb4] sm:$0xff]
    %v413 = vld [vmem:[#allocation12 + $0xbc] sm:$0xf]
    %v446 = vunpack.c.l.b16 %v382
    %v447 = vunpack.c.h.b16 %v382
    %v448 = vunpack.c.l.b16 %v383
    %v449 = vunpack.c.l.b16 %v384
    %v450 = vunpack.c.h.b16 %v384
    %v451 = vunpack.c.l.b16 %v385
    %v452 = vunpack.c.l.b16 %v386
    %v453 = vunpack.c.h.b16 %v386
    %v454 = vunpack.c.l.b16 %v387
    %v455 = vunpack.c.l.b16 %v388
    %v456 = vunpack.c.h.b16 %v388
    %v457 = vunpack.c.l.b16 %v389
    %v458 = vunpack.c.l.b16 %v390
    %v459 = vunpack.c.h.b16 %v390
    %v460 = vunpack.c.l.b16 %v391
    %v461 = vunpack.c.l.b16 %v392
    %v462 = vunpack.c.h.b16 %v392
    %v463 = vunpack.c.l.b16 %v393
    %v464 = vunpack.c.l.b16 %v394
    %v465 = vunpack.c.h.b16 %v394
    %v466 = vunpack.c.l.b16 %v395
    %v467 = vunpack.c.l.b16 %v396
    %v468 = vunpack.c.h.b16 %v396
    %v469 = vunpack.c.l.b16 %v397
    %v470 = vunpack.c.l.b16 %v398
    %v471 = vunpack.c.h.b16 %v398
    %v472 = vunpack.c.l.b16 %v399
    %v473 = vunpack.c.l.b16 %v400
    %v474 = vunpack.c.h.b16 %v400
    %v475 = vunpack.c.l.b16 %v401
    %v476 = vunpack.c.l.b16 %v402
    %v477 = vunpack.c.h.b16 %v402
    %v478 = vunpack.c.l.b16 %v403
    %v479 = vunpack.c.l.b16 %v404
    %v480 = vunpack.c.h.b16 %v404
    %v481 = vunpack.c.l.b16 %v405
    %v482 = vunpack.c.l.b16 %v406
    %v483 = vunpack.c.h.b16 %v406
    %v484 = vunpack.c.l.b16 %v407
    %v485 = vunpack.c.l.b16 %v408
    %v486 = vunpack.c.h.b16 %v408
    %v487 = vunpack.c.l.b16 %v409
    %v488 = vunpack.c.l.b16 %v410
    %v489 = vunpack.c.h.b16 %v410
    %v490 = vunpack.c.l.b16 %v411
    %v491 = vunpack.c.l.b16 %v412
    %v492 = vunpack.c.h.b16 %v412
    %v493 = vunpack.c.l.b16 %v413
    %v494 = vpack.c.b16 %v449, %v446
    %v495 = vpack.c.b16 %v450, %v447
    %v496 = vpack.c.b16 %v451, %v448
    %v497 = vpack.c.b16 %v455, %v452
    %v498 = vpack.c.b16 %v456, %v453
    %v499 = vpack.c.b16 %v457, %v454
    %v500 = vpack.c.b16 %v461, %v458
    %v501 = vpack.c.b16 %v462, %v459
    %v502 = vpack.c.b16 %v463, %v460
    %v503 = vpack.c.b16 %v467, %v464
    %v504 = vpack.c.b16 %v468, %v465
    %v505 = vpack.c.b16 %v469, %v466
    %v506 = vpack.c.b16 %v473, %v470
    %v507 = vpack.c.b16 %v474, %v471
    %v508 = vpack.c.b16 %v475, %v472
    %v509 = vpack.c.b16 %v479, %v476
    %v510 = vpack.c.b16 %v480, %v477
    %v511 = vpack.c.b16 %v481, %v478
    %v512 = vpack.c.b16 %v485, %v482
    %v513 = vpack.c.b16 %v486, %v483
    %v514 = vpack.c.b16 %v487, %v484
    %v515 = vpack.c.b16 %v491, %v488
    %v516 = vpack.c.b16 %v492, %v489
    %v517 = vpack.c.b16 %v493, %v490
    %542 = vmatprep.subr.bf16.mxu0 %v495
    %543 = vmatpush1.bf16.msra.mxu0 %v494
    %544 = vmatprep.subr.bf16.mxu0 %v498
    %545 = vmatpush1.bf16.msra.mxu0 %v497
    %546 = vmatprep.subr.bf16.mxu0 %v501
    %547 = vmatpush1.bf16.msra.mxu0 %v500
    %548 = vmatprep.subr.bf16.mxu0 %v504
    %549 = vmatpush1.bf16.msra.mxu0 %v503
    %550 = vmatprep.subr.bf16.mxu0 %v507
    %551 = vmatpush1.bf16.msra.mxu0 %v506
    %552 = vmatprep.subr.bf16.mxu0 %v510
    %553 = vmatpush1.bf16.msra.mxu0 %v509
    %554 = vmatprep.subr.bf16.mxu0 %v513
    %555 = vmatpush1.bf16.msra.mxu0 %v512
    %556 = vmatprep.subr.bf16.mxu0 %v516
    %557 = vmatpush1.bf16.msra.mxu0 %v515
    %558 = vmatprep.subr.bf16.mxu0 0
    %559 = vmatpush1.bf16.msra.mxu0 0
    %560 = vmatprep.subr.bf16.mxu0 0
    %561 = vmatpush1.bf16.msra.mxu0 0
    %562 = vmatprep.subr.bf16.mxu0 0
    %563 = vmatpush1.bf16.msra.mxu0 0
    %564 = vmatprep.subr.bf16.mxu0 0
    %565 = vmatpush1.bf16.msra.mxu0 0
    %566 = vmatprep.subr.bf16.mxu0 0
    %567 = vmatpush1.bf16.msra.mxu0 0
    %568 = vmatprep.subr.bf16.mxu0 0
    %569 = vmatpush1.bf16.msra.mxu0 0
    %570 = vmatprep.subr.bf16.mxu0 0
    %571 = vmatpush1.bf16.msra.mxu0 0
    %572 = vmatprep.subr.bf16.mxu0 0
    %573 = vmatpush1.bf16.msra.mxu0 0
    %574 = vmatprep.mubr.bf16.mxu0 0
    %575 = vmatmul.mubr.bf16.gmra.mrb[0].mxu0 %v381
    %v576 = vpop.f32.mrb[0].mxu0
    %v577 = vadd.f32 0.0, %v576
    %v578 = vpop.f32.mrb[0].mxu0
    %v579 = vadd.f32 0.0, %v578
    %v580 = vpop.f32.mrb[0].mxu0
    %v581 = vpop.f32.mrb[0].mxu0
    %582 = vdwg.mxu0
    %583 = vmatprep.subr.bf16.mxu0 0
    %584 = vmatpush1.bf16.msra.mxu0 %v496
    %585 = vmatprep.subr.bf16.mxu0 0
    %586 = vmatpush1.bf16.msra.mxu0 %v499
    %587 = vmatprep.subr.bf16.mxu0 0
    %588 = vmatpush1.bf16.msra.mxu0 %v502
    %589 = vmatprep.subr.bf16.mxu0 0
    %590 = vmatpush1.bf16.msra.mxu0 %v505
    %591 = vmatprep.subr.bf16.mxu0 0
    %592 = vmatpush1.bf16.msra.mxu0 %v508
    %593 = vmatprep.subr.bf16.mxu0 0
    %594 = vmatpush1.bf16.msra.mxu0 %v511
    %595 = vmatprep.subr.bf16.mxu0 0
    %596 = vmatpush1.bf16.msra.mxu0 %v514
    %597 = vmatprep.subr.bf16.mxu0 0
    %598 = vmatpush1.bf16.msra.mxu0 %v517
    %599 = vmatprep.subr.bf16.mxu0 0
    %600 = vmatpush1.bf16.msra.mxu0 0
    %601 = vmatprep.subr.bf16.mxu0 0
    %602 = vmatpush1.bf16.msra.mxu0 0
    %603 = vmatprep.subr.bf16.mxu0 0
    %604 = vmatpush1.bf16.msra.mxu0 0
    %605 = vmatprep.subr.bf16.mxu0 0
    %606 = vmatpush1.bf16.msra.mxu0 0
    %607 = vmatprep.subr.bf16.mxu0 0
    %608 = vmatpush1.bf16.msra.mxu0 0
    %609 = vmatprep.subr.bf16.mxu0 0
    %610 = vmatpush1.bf16.msra.mxu0 0
    %611 = vmatprep.subr.bf16.mxu0 0
    %612 = vmatpush1.bf16.msra.mxu0 0
    %613 = vmatprep.subr.bf16.mxu0 0
    %614 = vmatpush1.bf16.msra.mxu0 0
    %615 = vmatprep.mubr.bf16.mxu0 0
    %616 = vmatmul.mubr.bf16.gmra.mrb[0].mxu0 %v381
    %v617 = vpop.f32.mrb[0].mxu0
    %v618 = vadd.f32 0.0, %v617
    %v619 = vpop.f32.mrb[0].mxu0
    %v620 = vpop.f32.mrb[0].mxu0
    %v621 = vpop.f32.mrb[0].mxu0
    %622 = vdwg.mxu0
    %v623 = vld [vmem:[#allocation3] ss:$8 sm:$0x7]
    %v624 = vadd.f32 %v623, %v577
    %v625 = vxor.u32 %v624, 2147483648
    %v626 = vmul.f32 %v625, 1.442695
    %v627 = vpow.pop %v626
    %v628 = vadd.f32 %v627, 1.0
    %v629 = vrcp.pop %v628
    %v630 = vmul.f32 1.0, %v629
    %v632 = vrot.slane %v623, 1
    %v634 = vadd.f32 %v632, %v579
    %v635 = vxor.u32 %v634, 2147483648
    %v636 = vmul.f32 %v635, 1.442695
    %v637 = vpow.pop %v636
    %v638 = vadd.f32 %v637, 1.0
    %v639 = vrcp.pop %v638
    %v640 = vmul.f32 1.0, %v639
    %v641 = vadd.f32 %v618, %v379
    %v642 = vmul.f32 %v630, %v641
    %v643 = vrot.slane %v623, 2
    %v645 = vadd.f32 %v643, %v642
    %v646 = vtanh.pop %v645
    %v647 = vsub.f32 1.0, %v640
    %v648 = vmul.f32 %v647, %v646
    %v649 = vmul.f32 %v640, %v380
    %v650 = vadd.f32 %v648, %v649
    %651 = vst [vmem:[#allocation4] sm:$0x1] %v650
    %v652 = vpack.c.bf16 %v650, %v650
    %v653 = vld [vmem:[#allocation12] sm:$0xff]
    %v654 = vld [vmem:[#allocation12 + $0x8] sm:$0xf]
    %v655 = vld [vmem:[#allocation12 + $0xc] sm:$0xff]
    %v656 = vld [vmem:[#allocation12 + $0x14] sm:$0xf]
    %v657 = vld [vmem:[#allocation12 + $0x18] sm:$0xff]
    %v658 = vld [vmem:[#allocation12 + $0x20] sm:$0xf]
    %v659 = vld [vmem:[#allocation12 + $0x24] sm:$0xff]
    %v660 = vld [vmem:[#allocation12 + $0x2c] sm:$0xf]
    %v661 = vld [vmem:[#allocation12 + $0x30] sm:$0xff]
    %v662 = vld [vmem:[#allocation12 + $0x38] sm:$0xf]
    %v663 = vld [vmem:[#allocation12 + $0x3c] sm:$0xff]
    %v664 = vld [vmem:[#allocation12 + $0x44] sm:$0xf]
    %v665 = vld [vmem:[#allocation12 + $0x48] sm:$0xff]
    %v666 = vld [vmem:[#allocation12 + $0x50] sm:$0xf]
    %v667 = vld [vmem:[#allocation12 + $0x54] sm:$0xff]
    %v668 = vld [vmem:[#allocation12 + $0x5c] sm:$0xf]
    %v669 = vld [vmem:[#allocation12 + $0x60] sm:$0xff]
    %v670 = vld [vmem:[#allocation12 + $0x68] sm:$0xf]
    %v671 = vld [vmem:[#allocation12 + $0x6c] sm:$0xff]
    %v672 = vld [vmem:[#allocation12 + $0x74] sm:$0xf]
    %v673 = vld [vmem:[#allocation12 + $0x78] sm:$0xff]
    %v674 = vld [vmem:[#allocation12 + $0x80] sm:$0xf]
    %v675 = vld [vmem:[#allocation12 + $0x84] sm:$0xff]
    %v676 = vld [vmem:[#allocation12 + $0x8c] sm:$0xf]
    %v677 = vld [vmem:[#allocation12 + $0x90] sm:$0xff]
    %v678 = vld [vmem:[#allocation12 + $0x98] sm:$0xf]
    %v679 = vld [vmem:[#allocation12 + $0x9c] sm:$0xff]
    %v680 = vld [vmem:[#allocation12 + $0xa4] sm:$0xf]
    %v681 = vld [vmem:[#allocation12 + $0xa8] sm:$0xff]
    %v682 = vld [vmem:[#allocation12 + $0xb0] sm:$0xf]
    %v683 = vld [vmem:[#allocation12 + $0xb4] sm:$0xff]
    %v684 = vld [vmem:[#allocation12 + $0xbc] sm:$0xf]
    %v717 = vunpack.c.l.b16 %v653
    %v718 = vunpack.c.h.b16 %v653
    %v719 = vunpack.c.l.b16 %v654
    %v720 = vunpack.c.l.b16 %v655
    %v721 = vunpack.c.h.b16 %v655
    %v722 = vunpack.c.l.b16 %v656
    %v723 = vunpack.c.l.b16 %v657
    %v724 = vunpack.c.h.b16 %v657
    %v725 = vunpack.c.l.b16 %v658
    %v726 = vunpack.c.l.b16 %v659
    %v727 = vunpack.c.h.b16 %v659
    %v728 = vunpack.c.l.b16 %v660
    %v729 = vunpack.c.l.b16 %v661
    %v730 = vunpack.c.h.b16 %v661
    %v731 = vunpack.c.l.b16 %v662
    %v732 = vunpack.c.l.b16 %v663
    %v733 = vunpack.c.h.b16 %v663
    %v734 = vunpack.c.l.b16 %v664
    %v735 = vunpack.c.l.b16 %v665
    %v736 = vunpack.c.h.b16 %v665
    %v737 = vunpack.c.l.b16 %v666
    %v738 = vunpack.c.l.b16 %v667
    %v739 = vunpack.c.h.b16 %v667
    %v740 = vunpack.c.l.b16 %v668
    %v741 = vunpack.c.l.b16 %v669
    %v742 = vunpack.c.h.b16 %v669
    %v743 = vunpack.c.l.b16 %v670
    %v744 = vunpack.c.l.b16 %v671
    %v745 = vunpack.c.h.b16 %v671
    %v746 = vunpack.c.l.b16 %v672
    %v747 = vunpack.c.l.b16 %v673
    %v748 = vunpack.c.h.b16 %v673
    %v749 = vunpack.c.l.b16 %v674
    %v750 = vunpack.c.l.b16 %v675
    %v751 = vunpack.c.h.b16 %v675
    %v752 = vunpack.c.l.b16 %v676
    %v753 = vunpack.c.l.b16 %v677
    %v754 = vunpack.c.h.b16 %v677
    %v755 = vunpack.c.l.b16 %v678
    %v756 = vunpack.c.l.b16 %v679
    %v757 = vunpack.c.h.b16 %v679
    %v758 = vunpack.c.l.b16 %v680
    %v759 = vunpack.c.l.b16 %v681
    %v760 = vunpack.c.h.b16 %v681
    %v761 = vunpack.c.l.b16 %v682
    %v762 = vunpack.c.l.b16 %v683
    %v763 = vunpack.c.h.b16 %v683
    %v764 = vunpack.c.l.b16 %v684
    %v765 = vpack.c.b16 %v720, %v717
    %v766 = vpack.c.b16 %v721, %v718
    %v767 = vpack.c.b16 %v722, %v719
    %v768 = vpack.c.b16 %v726, %v723
    %v769 = vpack.c.b16 %v727, %v724
    %v770 = vpack.c.b16 %v728, %v725
    %v771 = vpack.c.b16 %v732, %v729
    %v772 = vpack.c.b16 %v733, %v730
    %v773 = vpack.c.b16 %v734, %v731
    %v774 = vpack.c.b16 %v738, %v735
    %v775 = vpack.c.b16 %v739, %v736
    %v776 = vpack.c.b16 %v740, %v737
    %v777 = vpack.c.b16 %v744, %v741
    %v778 = vpack.c.b16 %v745, %v742
    %v779 = vpack.c.b16 %v746, %v743
    %v780 = vpack.c.b16 %v750, %v747
    %v781 = vpack.c.b16 %v751, %v748
    %v782 = vpack.c.b16 %v752, %v749
    %v783 = vpack.c.b16 %v756, %v753
    %v784 = vpack.c.b16 %v757, %v754
    %v785 = vpack.c.b16 %v758, %v755
    %v786 = vpack.c.b16 %v762, %v759
    %v787 = vpack.c.b16 %v763, %v760
    %v788 = vpack.c.b16 %v764, %v761
    %813 = vmatprep.subr.bf16.mxu0 %v766
    %814 = vmatpush1.bf16.msra.mxu0 %v765
    %815 = vmatprep.subr.bf16.mxu0 %v769
    %816 = vmatpush1.bf16.msra.mxu0 %v768
    %817 = vmatprep.subr.bf16.mxu0 %v772
    %818 = vmatpush1.bf16.msra.mxu0 %v771
    %819 = vmatprep.subr.bf16.mxu0 %v775
    %820 = vmatpush1.bf16.msra.mxu0 %v774
    %821 = vmatprep.subr.bf16.mxu0 %v778
    %822 = vmatpush1.bf16.msra.mxu0 %v777
    %823 = vmatprep.subr.bf16.mxu0 %v781
    %824 = vmatpush1.bf16.msra.mxu0 %v780
    %825 = vmatprep.subr.bf16.mxu0 %v784
    %826 = vmatpush1.bf16.msra.mxu0 %v783
    %827 = vmatprep.subr.bf16.mxu0 %v787
    %828 = vmatpush1.bf16.msra.mxu0 %v786
    %829 = vmatprep.subr.bf16.mxu0 0
    %830 = vmatpush1.bf16.msra.mxu0 0
    %831 = vmatprep.subr.bf16.mxu0 0
    %832 = vmatpush1.bf16.msra.mxu0 0
    %833 = vmatprep.subr.bf16.mxu0 0
    %834 = vmatpush1.bf16.msra.mxu0 0
    %835 = vmatprep.subr.bf16.mxu0 0
    %836 = vmatpush1.bf16.msra.mxu0 0
    %837 = vmatprep.subr.bf16.mxu0 0
    %838 = vmatpush1.bf16.msra.mxu0 0
    %839 = vmatprep.subr.bf16.mxu0 0
    %840 = vmatpush1.bf16.msra.mxu0 0
    %841 = vmatprep.subr.bf16.mxu0 0
    %842 = vmatpush1.bf16.msra.mxu0 0
    %843 = vmatprep.subr.bf16.mxu0 0
    %844 = vmatpush1.bf16.msra.mxu0 0
    %845 = vmatprep.mubr.bf16.mxu0 0
    %846 = vmatmul.mubr.bf16.gmra.mrb[0].mxu0 %v652
    %v847 = vpop.f32.mrb[0].mxu0
    %v848 = vadd.f32 0.0, %v847
    %v849 = vpop.f32.mrb[0].mxu0
    %v850 = vadd.f32 0.0, %v849
    %v851 = vpop.f32.mrb[0].mxu0
    %v852 = vpop.f32.mrb[0].mxu0
    %853 = vdwg.mxu0
    %854 = vmatprep.subr.bf16.mxu0 0
    %855 = vmatpush1.bf16.msra.mxu0 %v767
    %856 = vmatprep.subr.bf16.mxu0 0
    %857 = vmatpush1.bf16.msra.mxu0 %v770
    %858 = vmatprep.subr.bf16.mxu0 0
    %859 = vmatpush1.bf16.msra.mxu0 %v773
    %860 = vmatprep.subr.bf16.mxu0 0
    %861 = vmatpush1.bf16.msra.mxu0 %v776
    %862 = vmatprep.subr.bf16.mxu0 0
    %863 = vmatpush1.bf16.msra.mxu0 %v779
    %864 = vmatprep.subr.bf16.mxu0 0
    %865 = vmatpush1.bf16.msra.mxu0 %v782
    %866 = vmatprep.subr.bf16.mxu0 0
    %867 = vmatpush1.bf16.msra.mxu0 %v785
    %868 = vmatprep.subr.bf16.mxu0 0
    %869 = vmatpush1.bf16.msra.mxu0 %v788
    %870 = vmatprep.subr.bf16.mxu0 0
    %871 = vmatpush1.bf16.msra.mxu0 0
    %872 = vmatprep.subr.bf16.mxu0 0
    %873 = vmatpush1.bf16.msra.mxu0 0
    %874 = vmatprep.subr.bf16.mxu0 0
    %875 = vmatpush1.bf16.msra.mxu0 0
    %876 = vmatprep.subr.bf16.mxu0 0
    %877 = vmatpush1.bf16.msra.mxu0 0
    %878 = vmatprep.subr.bf16.mxu0 0
    %879 = vmatpush1.bf16.msra.mxu0 0
    %880 = vmatprep.subr.bf16.mxu0 0
    %881 = vmatpush1.bf16.msra.mxu0 0
    %882 = vmatprep.subr.bf16.mxu0 0
    %883 = vmatpush1.bf16.msra.mxu0 0
    %884 = vmatprep.subr.bf16.mxu0 0
    %885 = vmatpush1.bf16.msra.mxu0 0
    %886 = vmatprep.mubr.bf16.mxu0 0
    %887 = vmatmul.mubr.bf16.gmra.mrb[0].mxu0 %v652
    %v888 = vpop.f32.mrb[0].mxu0
    %v889 = vadd.f32 0.0, %v888
    %v890 = vpop.f32.mrb[0].mxu0
    %v891 = vpop.f32.mrb[0].mxu0
    %v892 = vpop.f32.mrb[0].mxu0
    %893 = vdwg.mxu0
    %s894 = scalar_lea.vmem [#allocation3], 1
    %v895 = vld [vmem:[%s894] ss:$8 sm:$0x7]
    %v896 = vadd.f32 %v895, %v848
    %v897 = vxor.u32 %v896, 2147483648
    %v898 = vmul.f32 %v897, 1.442695
    %v899 = vpow.pop %v898
    %v900 = vadd.f32 %v899, 1.0
    %v901 = vrcp.pop %v900
    %v902 = vmul.f32 1.0, %v901
    %v904 = vrot.slane %v895, 1
    %v906 = vadd.f32 %v904, %v850
    %v907 = vxor.u32 %v906, 2147483648
    %v908 = vmul.f32 %v907, 1.442695
    %v909 = vpow.pop %v908
    %v910 = vadd.f32 %v909, 1.0
    %v911 = vrcp.pop %v910
    %v912 = vmul.f32 1.0, %v911
    %v913 = vadd.f32 %v889, %v379
    %v914 = vmul.f32 %v902, %v913
    %v915 = vrot.slane %v895, 2
    %v917 = vadd.f32 %v915, %v914
    %v918 = vtanh.pop %v917
    %v919 = vsub.f32 1.0, %v912
    %v920 = vmul.f32 %v919, %v918
    %v921 = vmul.f32 %v912, %v650
    %v922 = vadd.f32 %v920, %v921
    %923 = vst [vmem:[#allocation4 + $0x1] sm:$0x1] %v922
    %v924 = vpack.c.bf16 %v922, %v922
    %v925 = vld [vmem:[#allocation12] sm:$0xff]
    %v926 = vld [vmem:[#allocation12 + $0x8] sm:$0xf]
    %v927 = vld [vmem:[#allocation12 + $0xc] sm:$0xff]
    %v928 = vld [vmem:[#allocation12 + $0x14] sm:$0xf]
    %v929 = vld [vmem:[#allocation12 + $0x18] sm:$0xff]
    %v930 = vld [vmem:[#allocation12 + $0x20] sm:$0xf]
    %v931 = vld [vmem:[#allocation12 + $0x24] sm:$0xff]
    %v932 = vld [vmem:[#allocation12 + $0x2c] sm:$0xf]
    %v933 = vld [vmem:[#allocation12 + $0x30] sm:$0xff]
    %v934 = vld [vmem:[#allocation12 + $0x38] sm:$0xf]
    %v935 = vld [vmem:[#allocation12 + $0x3c] sm:$0xff]
    %v936 = vld [vmem:[#allocation12 + $0x44] sm:$0xf]
    %v937 = vld [vmem:[#allocation12 + $0x48] sm:$0xff]
    %v938 = vld [vmem:[#allocation12 + $0x50] sm:$0xf]
    %v939 = vld [vmem:[#allocation12 + $0x54] sm:$0xff]
    %v940 = vld [vmem:[#allocation12 + $0x5c] sm:$0xf]
    %v941 = vld [vmem:[#allocation12 + $0x60] sm:$0xff]
    %v942 = vld [vmem:[#allocation12 + $0x68] sm:$0xf]
    %v943 = vld [vmem:[#allocation12 + $0x6c] sm:$0xff]
    %v944 = vld [vmem:[#allocation12 + $0x74] sm:$0xf]
    %v945 = vld [vmem:[#allocation12 + $0x78] sm:$0xff]
    %v946 = vld [vmem:[#allocation12 + $0x80] sm:$0xf]
    %v947 = vld [vmem:[#allocation12 + $0x84] sm:$0xff]
    %v948 = vld [vmem:[#allocation12 + $0x8c] sm:$0xf]
    %v949 = vld [vmem:[#allocation12 + $0x90] sm:$0xff]
    %v950 = vld [vmem:[#allocation12 + $0x98] sm:$0xf]
    %v951 = vld [vmem:[#allocation12 + $0x9c] sm:$0xff]
    %v952 = vld [vmem:[#allocation12 + $0xa4] sm:$0xf]
    %v953 = vld [vmem:[#allocation12 + $0xa8] sm:$0xff]
    %v954 = vld [vmem:[#allocation12 + $0xb0] sm:$0xf]
    %v955 = vld [vmem:[#allocation12 + $0xb4] sm:$0xff]
    %v956 = vld [vmem:[#allocation12 + $0xbc] sm:$0xf]
    %v989 = vunpack.c.l.b16 %v925
    %v990 = vunpack.c.h.b16 %v925
    %v991 = vunpack.c.l.b16 %v926
    %v992 = vunpack.c.l.b16 %v927
    %v993 = vunpack.c.h.b16 %v927
    %v994 = vunpack.c.l.b16 %v928
    %v995 = vunpack.c.l.b16 %v929
    %v996 = vunpack.c.h.b16 %v929
    %v997 = vunpack.c.l.b16 %v930
    %v998 = vunpack.c.l.b16 %v931
    %v999 = vunpack.c.h.b16 %v931
    %v1000 = vunpack.c.l.b16 %v932
    %v1001 = vunpack.c.l.b16 %v933
    %v1002 = vunpack.c.h.b16 %v933
    %v1003 = vunpack.c.l.b16 %v934
    %v1004 = vunpack.c.l.b16 %v935
    %v1005 = vunpack.c.h.b16 %v935
    %v1006 = vunpack.c.l.b16 %v936
    %v1007 = vunpack.c.l.b16 %v937
    %v1008 = vunpack.c.h.b16 %v937
    %v1009 = vunpack.c.l.b16 %v938
    %v1010 = vunpack.c.l.b16 %v939
    %v1011 = vunpack.c.h.b16 %v939
    %v1012 = vunpack.c.l.b16 %v940
    %v1013 = vunpack.c.l.b16 %v941
    %v1014 = vunpack.c.h.b16 %v941
    %v1015 = vunpack.c.l.b16 %v942
    %v1016 = vunpack.c.l.b16 %v943
    %v1017 = vunpack.c.h.b16 %v943
    %v1018 = vunpack.c.l.b16 %v944
    %v1019 = vunpack.c.l.b16 %v945
    %v1020 = vunpack.c.h.b16 %v945
    %v1021 = vunpack.c.l.b16 %v946
    %v1022 = vunpack.c.l.b16 %v947
    %v1023 = vunpack.c.h.b16 %v947
    %v1024 = vunpack.c.l.b16 %v948
    %v1025 = vunpack.c.l.b16 %v949
    %v1026 = vunpack.c.h.b16 %v949
    %v1027 = vunpack.c.l.b16 %v950
    %v1028 = vunpack.c.l.b16 %v951
    %v1029 = vunpack.c.h.b16 %v951
    %v1030 = vunpack.c.l.b16 %v952
    %v1031 = vunpack.c.l.b16 %v953
    %v1032 = vunpack.c.h.b16 %v953
    %v1033 = vunpack.c.l.b16 %v954
    %v1034 = vunpack.c.l.b16 %v955
    %v1035 = vunpack.c.h.b16 %v955
    %v1036 = vunpack.c.l.b16 %v956
    %v1037 = vpack.c.b16 %v992, %v989
    %v1038 = vpack.c.b16 %v993, %v990
    %v1039 = vpack.c.b16 %v994, %v991
    %v1040 = vpack.c.b16 %v998, %v995
    %v1041 = vpack.c.b16 %v999, %v996
    %v1042 = vpack.c.b16 %v1000, %v997
    %v1043 = vpack.c.b16 %v1004, %v1001
    %v1044 = vpack.c.b16 %v1005, %v1002
    %v1045 = vpack.c.b16 %v1006, %v1003
    %v1046 = vpack.c.b16 %v1010, %v1007
    %v1047 = vpack.c.b16 %v1011, %v1008
    %v1048 = vpack.c.b16 %v1012, %v1009
    %v1049 = vpack.c.b16 %v1016, %v1013
    %v1050 = vpack.c.b16 %v1017, %v1014
    %v1051 = vpack.c.b16 %v1018, %v1015
    %v1052 = vpack.c.b16 %v1022, %v1019
    %v1053 = vpack.c.b16 %v1023, %v1020
    %v1054 = vpack.c.b16 %v1024, %v1021
    %v1055 = vpack.c.b16 %v1028, %v1025
    %v1056 = vpack.c.b16 %v1029, %v1026
    %v1057 = vpack.c.b16 %v1030, %v1027
    %v1058 = vpack.c.b16 %v1034, %v1031
    %v1059 = vpack.c.b16 %v1035, %v1032
    %v1060 = vpack.c.b16 %v1036, %v1033
    %1085 = vmatprep.subr.bf16.mxu0 %v1038
    %1086 = vmatpush1.bf16.msra.mxu0 %v1037
    %1087 = vmatprep.subr.bf16.mxu0 %v1041
    %1088 = vmatpush1.bf16.msra.mxu0 %v1040
    %1089 = vmatprep.subr.bf16.mxu0 %v1044
    %1090 = vmatpush1.bf16.msra.mxu0 %v1043
    %1091 = vmatprep.subr.bf16.mxu0 %v1047
    %1092 = vmatpush1.bf16.msra.mxu0 %v1046
    %1093 = vmatprep.subr.bf16.mxu0 %v1050
    %1094 = vmatpush1.bf16.msra.mxu0 %v1049
    %1095 = vmatprep.subr.bf16.mxu0 %v1053
    %1096 = vmatpush1.bf16.msra.mxu0 %v1052
    %1097 = vmatprep.subr.bf16.mxu0 %v1056
    %1098 = vmatpush1.bf16.msra.mxu0 %v1055
    %1099 = vmatprep.subr.bf16.mxu0 %v1059
    %1100 = vmatpush1.bf16.msra.mxu0 %v1058
    %1101 = vmatprep.subr.bf16.mxu0 0
    %1102 = vmatpush1.bf16.msra.mxu0 0
    %1103 = vmatprep.subr.bf16.mxu0 0
    %1104 = vmatpush1.bf16.msra.mxu0 0
    %1105 = vmatprep.subr.bf16.mxu0 0
    %1106 = vmatpush1.bf16.msra.mxu0 0
    %1107 = vmatprep.subr.bf16.mxu0 0
    %1108 = vmatpush1.bf16.msra.mxu0 0
    %1109 = vmatprep.subr.bf16.mxu0 0
    %1110 = vmatpush1.bf16.msra.mxu0 0
    %1111 = vmatprep.subr.bf16.mxu0 0
    %1112 = vmatpush1.bf16.msra.mxu0 0
    %1113 = vmatprep.subr.bf16.mxu0 0
    %1114 = vmatpush1.bf16.msra.mxu0 0
    %1115 = vmatprep.subr.bf16.mxu0 0
    %1116 = vmatpush1.bf16.msra.mxu0 0
    %1117 = vmatprep.mubr.bf16.mxu0 0
    %1118 = vmatmul.mubr.bf16.gmra.mrb[0].mxu0 %v924
    %v1119 = vpop.f32.mrb[0].mxu0
    %v1120 = vadd.f32 0.0, %v1119
    %v1121 = vpop.f32.mrb[0].mxu0
    %v1122 = vadd.f32 0.0, %v1121
    %v1123 = vpop.f32.mrb[0].mxu0
    %v1124 = vpop.f32.mrb[0].mxu0
    %1125 = vdwg.mxu0
    %1126 = vmatprep.subr.bf16.mxu0 0
    %1127 = vmatpush1.bf16.msra.mxu0 %v1039
    %1128 = vmatprep.subr.bf16.mxu0 0
    %1129 = vmatpush1.bf16.msra.mxu0 %v1042
    %1130 = vmatprep.subr.bf16.mxu0 0
    %1131 = vmatpush1.bf16.msra.mxu0 %v1045
    %1132 = vmatprep.subr.bf16.mxu0 0
    %1133 = vmatpush1.bf16.msra.mxu0 %v1048
    %1134 = vmatprep.subr.bf16.mxu0 0
    %1135 = vmatpush1.bf16.msra.mxu0 %v1051
    %1136 = vmatprep.subr.bf16.mxu0 0
    %1137 = vmatpush1.bf16.msra.mxu0 %v1054
    %1138 = vmatprep.subr.bf16.mxu0 0
    %1139 = vmatpush1.bf16.msra.mxu0 %v1057
    %1140 = vmatprep.subr.bf16.mxu0 0
    %1141 = vmatpush1.bf16.msra.mxu0 %v1060
    %1142 = vmatprep.subr.bf16.mxu0 0
    %1143 = vmatpush1.bf16.msra.mxu0 0
    %1144 = vmatprep.subr.bf16.mxu0 0
    %1145 = vmatpush1.bf16.msra.mxu0 0
    %1146 = vmatprep.subr.bf16.mxu0 0
    %1147 = vmatpush1.bf16.msra.mxu0 0
    %1148 = vmatprep.subr.bf16.mxu0 0
    %1149 = vmatpush1.bf16.msra.mxu0 0
    %1150 = vmatprep.subr.bf16.mxu0 0
    %1151 = vmatpush1.bf16.msra.mxu0 0
    %1152 = vmatprep.subr.bf16.mxu0 0
    %1153 = vmatpush1.bf16.msra.mxu0 0
    %1154 = vmatprep.subr.bf16.mxu0 0
    %1155 = vmatpush1.bf16.msra.mxu0 0
    %1156 = vmatprep.subr.bf16.mxu0 0
    %1157 = vmatpush1.bf16.msra.mxu0 0
    %1158 = vmatprep.mubr.bf16.mxu0 0
    %1159 = vmatmul.mubr.bf16.gmra.mrb[0].mxu0 %v924
    %v1160 = vpop.f32.mrb[0].mxu0
    %v1161 = vadd.f32 0.0, %v1160
    %v1162 = vpop.f32.mrb[0].mxu0
    %v1163 = vpop.f32.mrb[0].mxu0
    %v1164 = vpop.f32.mrb[0].mxu0
    %1165 = vdwg.mxu0
    %s1166 = scalar_lea.vmem [#allocation3], 2
    %v1167 = vld [vmem:[%s1166] ss:$8 sm:$0x7]
    %v1168 = vadd.f32 %v1167, %v1120
    %v1169 = vxor.u32 %v1168, 2147483648
    %v1170 = vmul.f32 %v1169, 1.442695
    %v1171 = vpow.pop %v1170
    %v1172 = vadd.f32 %v1171, 1.0
    %v1173 = vrcp.pop %v1172
    %v1174 = vmul.f32 1.0, %v1173
    %v1176 = vrot.slane %v1167, 1
    %v1178 = vadd.f32 %v1176, %v1122
    %v1179 = vxor.u32 %v1178, 2147483648
    %v1180 = vmul.f32 %v1179, 1.442695
    %v1181 = vpow.pop %v1180
    %v1182 = vadd.f32 %v1181, 1.0
    %v1183 = vrcp.pop %v1182
    %v1184 = vmul.f32 1.0, %v1183
    %v1185 = vadd.f32 %v1161, %v379
    %v1186 = vmul.f32 %v1174, %v1185
    %v1187 = vrot.slane %v1167, 2
    %v1189 = vadd.f32 %v1187, %v1186
    %v1190 = vtanh.pop %v1189
    %v1191 = vsub.f32 1.0, %v1184
    %v1192 = vmul.f32 %v1191, %v1190
    %v1193 = vmul.f32 %v1184, %v922
    %v1194 = vadd.f32 %v1192, %v1193
    %1195 = vst [vmem:[#allocation4 + $0x2] sm:$0x1] %v1194
    %v1196 = vpack.c.bf16 %v1194, %v1194
    %v1197 = vld [vmem:[#allocation12] sm:$0xff]
    %v1198 = vld [vmem:[#allocation12 + $0x8] sm:$0xf]
    %v1199 = vld [vmem:[#allocation12 + $0xc] sm:$0xff]
    %v1200 = vld [vmem:[#allocation12 + $0x14] sm:$0xf]
    %v1201 = vld [vmem:[#allocation12 + $0x18] sm:$0xff]
    %v1202 = vld [vmem:[#allocation12 + $0x20] sm:$0xf]
    %v1203 = vld [vmem:[#allocation12 + $0x24] sm:$0xff]
    %v1204 = vld [vmem:[#allocation12 + $0x2c] sm:$0xf]
    %v1205 = vld [vmem:[#allocation12 + $0x30] sm:$0xff]
    %v1206 = vld [vmem:[#allocation12 + $0x38] sm:$0xf]
    %v1207 = vld [vmem:[#allocation12 + $0x3c] sm:$0xff]
    %v1208 = vld [vmem:[#allocation12 + $0x44] sm:$0xf]
    %v1209 = vld [vmem:[#allocation12 + $0x48] sm:$0xff]
    %v1210 = vld [vmem:[#allocation12 + $0x50] sm:$0xf]
    %v1211 = vld [vmem:[#allocation12 + $0x54] sm:$0xff]
    %v1212 = vld [vmem:[#allocation12 + $0x5c] sm:$0xf]
    %v1213 = vld [vmem:[#allocation12 + $0x60] sm:$0xff]
    %v1214 = vld [vmem:[#allocation12 + $0x68] sm:$0xf]
    %v1215 = vld [vmem:[#allocation12 + $0x6c] sm:$0xff]
    %v1216 = vld [vmem:[#allocation12 + $0x74] sm:$0xf]
    %v1217 = vld [vmem:[#allocation12 + $0x78] sm:$0xff]
    %v1218 = vld [vmem:[#allocation12 + $0x80] sm:$0xf]
    %v1219 = vld [vmem:[#allocation12 + $0x84] sm:$0xff]
    %v1220 = vld [vmem:[#allocation12 + $0x8c] sm:$0xf]
    %v1221 = vld [vmem:[#allocation12 + $0x90] sm:$0xff]
    %v1222 = vld [vmem:[#allocation12 + $0x98] sm:$0xf]
    %v1223 = vld [vmem:[#allocation12 + $0x9c] sm:$0xff]
    %v1224 = vld [vmem:[#allocation12 + $0xa4] sm:$0xf]
    %v1225 = vld [vmem:[#allocation12 + $0xa8] sm:$0xff]
    %v1226 = vld [vmem:[#allocation12 + $0xb0] sm:$0xf]
    %v1227 = vld [vmem:[#allocation12 + $0xb4] sm:$0xff]
    %v1228 = vld [vmem:[#allocation12 + $0xbc] sm:$0xf]
    %v1261 = vunpack.c.l.b16 %v1197
    %v1262 = vunpack.c.h.b16 %v1197
    %v1263 = vunpack.c.l.b16 %v1198
    %v1264 = vunpack.c.l.b16 %v1199
    %v1265 = vunpack.c.h.b16 %v1199
    %v1266 = vunpack.c.l.b16 %v1200
    %v1267 = vunpack.c.l.b16 %v1201
    %v1268 = vunpack.c.h.b16 %v1201
    %v1269 = vunpack.c.l.b16 %v1202
    %v1270 = vunpack.c.l.b16 %v1203
    %v1271 = vunpack.c.h.b16 %v1203
    %v1272 = vunpack.c.l.b16 %v1204
    %v1273 = vunpack.c.l.b16 %v1205
    %v1274 = vunpack.c.h.b16 %v1205
    %v1275 = vunpack.c.l.b16 %v1206
    %v1276 = vunpack.c.l.b16 %v1207
    %v1277 = vunpack.c.h.b16 %v1207
    %v1278 = vunpack.c.l.b16 %v1208
    %v1279 = vunpack.c.l.b16 %v1209
    %v1280 = vunpack.c.h.b16 %v1209
    %v1281 = vunpack.c.l.b16 %v1210
    %v1282 = vunpack.c.l.b16 %v1211
    %v1283 = vunpack.c.h.b16 %v1211
    %v1284 = vunpack.c.l.b16 %v1212
    %v1285 = vunpack.c.l.b16 %v1213
    %v1286 = vunpack.c.h.b16 %v1213
    %v1287 = vunpack.c.l.b16 %v1214
    %v1288 = vunpack.c.l.b16 %v1215
    %v1289 = vunpack.c.h.b16 %v1215
    %v1290 = vunpack.c.l.b16 %v1216
    %v1291 = vunpack.c.l.b16 %v1217
    %v1292 = vunpack.c.h.b16 %v1217
    %v1293 = vunpack.c.l.b16 %v1218
    %v1294 = vunpack.c.l.b16 %v1219
    %v1295 = vunpack.c.h.b16 %v1219
    %v1296 = vunpack.c.l.b16 %v1220
    %v1297 = vunpack.c.l.b16 %v1221
    %v1298 = vunpack.c.h.b16 %v1221
    %v1299 = vunpack.c.l.b16 %v1222
    %v1300 = vunpack.c.l.b16 %v1223
    %v1301 = vunpack.c.h.b16 %v1223
    %v1302 = vunpack.c.l.b16 %v1224
    %v1303 = vunpack.c.l.b16 %v1225
    %v1304 = vunpack.c.h.b16 %v1225
    %v1305 = vunpack.c.l.b16 %v1226
    %v1306 = vunpack.c.l.b16 %v1227
    %v1307 = vunpack.c.h.b16 %v1227
    %v1308 = vunpack.c.l.b16 %v1228
    %v1309 = vpack.c.b16 %v1264, %v1261
    %v1310 = vpack.c.b16 %v1265, %v1262
    %v1311 = vpack.c.b16 %v1266, %v1263
    %v1312 = vpack.c.b16 %v1270, %v1267
    %v1313 = vpack.c.b16 %v1271, %v1268
    %v1314 = vpack.c.b16 %v1272, %v1269
    %v1315 = vpack.c.b16 %v1276, %v1273
    %v1316 = vpack.c.b16 %v1277, %v1274
    %v1317 = vpack.c.b16 %v1278, %v1275
    %v1318 = vpack.c.b16 %v1282, %v1279
    %v1319 = vpack.c.b16 %v1283, %v1280
    %v1320 = vpack.c.b16 %v1284, %v1281
    %v1321 = vpack.c.b16 %v1288, %v1285
    %v1322 = vpack.c.b16 %v1289, %v1286
    %v1323 = vpack.c.b16 %v1290, %v1287
    %v1324 = vpack.c.b16 %v1294, %v1291
    %v1325 = vpack.c.b16 %v1295, %v1292
    %v1326 = vpack.c.b16 %v1296, %v1293
    %v1327 = vpack.c.b16 %v1300, %v1297
    %v1328 = vpack.c.b16 %v1301, %v1298
    %v1329 = vpack.c.b16 %v1302, %v1299
    %v1330 = vpack.c.b16 %v1306, %v1303
    %v1331 = vpack.c.b16 %v1307, %v1304
    %v1332 = vpack.c.b16 %v1308, %v1305
    %1357 = vmatprep.subr.bf16.mxu0 %v1310
    %1358 = vmatpush1.bf16.msra.mxu0 %v1309
    %1359 = vmatprep.subr.bf16.mxu0 %v1313
    %1360 = vmatpush1.bf16.msra.mxu0 %v1312
    %1361 = vmatprep.subr.bf16.mxu0 %v1316
    %1362 = vmatpush1.bf16.msra.mxu0 %v1315
    %1363 = vmatprep.subr.bf16.mxu0 %v1319
    %1364 = vmatpush1.bf16.msra.mxu0 %v1318
    %1365 = vmatprep.subr.bf16.mxu0 %v1322
    %1366 = vmatpush1.bf16.msra.mxu0 %v1321
    %1367 = vmatprep.subr.bf16.mxu0 %v1325
    %1368 = vmatpush1.bf16.msra.mxu0 %v1324
    %1369 = vmatprep.subr.bf16.mxu0 %v1328
    %1370 = vmatpush1.bf16.msra.mxu0 %v1327
    %1371 = vmatprep.subr.bf16.mxu0 %v1331
    %1372 = vmatpush1.bf16.msra.mxu0 %v1330
    %1373 = vmatprep.subr.bf16.mxu0 0
    %1374 = vmatpush1.bf16.msra.mxu0 0
    %1375 = vmatprep.subr.bf16.mxu0 0
    %1376 = vmatpush1.bf16.msra.mxu0 0
    %1377 = vmatprep.subr.bf16.mxu0 0
    %1378 = vmatpush1.bf16.msra.mxu0 0
    %1379 = vmatprep.subr.bf16.mxu0 0
    %1380 = vmatpush1.bf16.msra.mxu0 0
    %1381 = vmatprep.subr.bf16.mxu0 0
    %1382 = vmatpush1.bf16.msra.mxu0 0
    %1383 = vmatprep.subr.bf16.mxu0 0
    %1384 = vmatpush1.bf16.msra.mxu0 0
    %1385 = vmatprep.subr.bf16.mxu0 0
    %1386 = vmatpush1.bf16.msra.mxu0 0
    %1387 = vmatprep.subr.bf16.mxu0 0
    %1388 = vmatpush1.bf16.msra.mxu0 0
    %1389 = vmatprep.mubr.bf16.mxu0 0
    %1390 = vmatmul.mubr.bf16.gmra.mrb[0].mxu0 %v1196
    %v1391 = vpop.f32.mrb[0].mxu0
    %v1392 = vadd.f32 0.0, %v1391
    %v1393 = vpop.f32.mrb[0].mxu0
    %v1394 = vadd.f32 0.0, %v1393
    %v1395 = vpop.f32.mrb[0].mxu0
    %v1396 = vpop.f32.mrb[0].mxu0
    %1397 = vdwg.mxu0
    %1398 = vmatprep.subr.bf16.mxu0 0
    %1399 = vmatpush1.bf16.msra.mxu0 %v1311
    %1400 = vmatprep.subr.bf16.mxu0 0
    %1401 = vmatpush1.bf16.msra.mxu0 %v1314
    %1402 = vmatprep.subr.bf16.mxu0 0
    %1403 = vmatpush1.bf16.msra.mxu0 %v1317
    %1404 = vmatprep.subr.bf16.mxu0 0
    %1405 = vmatpush1.bf16.msra.mxu0 %v1320
    %1406 = vmatprep.subr.bf16.mxu0 0
    %1407 = vmatpush1.bf16.msra.mxu0 %v1323
    %1408 = vmatprep.subr.bf16.mxu0 0
    %1409 = vmatpush1.bf16.msra.mxu0 %v1326
    %1410 = vmatprep.subr.bf16.mxu0 0
    %1411 = vmatpush1.bf16.msra.mxu0 %v1329
    %1412 = vmatprep.subr.bf16.mxu0 0
    %1413 = vmatpush1.bf16.msra.mxu0 %v1332
    %1414 = vmatprep.subr.bf16.mxu0 0
    %1415 = vmatpush1.bf16.msra.mxu0 0
    %1416 = vmatprep.subr.bf16.mxu0 0
    %1417 = vmatpush1.bf16.msra.mxu0 0
    %1418 = vmatprep.subr.bf16.mxu0 0
    %1419 = vmatpush1.bf16.msra.mxu0 0
    %1420 = vmatprep.subr.bf16.mxu0 0
    %1421 = vmatpush1.bf16.msra.mxu0 0
    %1422 = vmatprep.subr.bf16.mxu0 0
    %1423 = vmatpush1.bf16.msra.mxu0 0
    %1424 = vmatprep.subr.bf16.mxu0 0
    %1425 = vmatpush1.bf16.msra.mxu0 0
    %1426 = vmatprep.subr.bf16.mxu0 0
    %1427 = vmatpush1.bf16.msra.mxu0 0
    %1428 = vmatprep.subr.bf16.mxu0 0
    %1429 = vmatpush1.bf16.msra.mxu0 0
    %1430 = vmatprep.mubr.bf16.mxu0 0
    %1431 = vmatmul.mubr.bf16.gmra.mrb[0].mxu0 %v1196
    %v1432 = vpop.f32.mrb[0].mxu0
    %v1433 = vadd.f32 0.0, %v1432
    %v1434 = vpop.f32.mrb[0].mxu0
    %v1435 = vpop.f32.mrb[0].mxu0
    %v1436 = vpop.f32.mrb[0].mxu0
    %1437 = vdwg.mxu0
    %s1438 = scalar_lea.vmem [#allocation3], 3
    %v1439 = vld [vmem:[%s1438] ss:$8 sm:$0x7]
    %v1440 = vadd.f32 %v1439, %v1392
    %v1441 = vxor.u32 %v1440, 2147483648
    %v1442 = vmul.f32 %v1441, 1.442695
    %v1443 = vpow.pop %v1442
    %v1444 = vadd.f32 %v1443, 1.0
    %v1445 = vrcp.pop %v1444
    %v1446 = vmul.f32 1.0, %v1445
    %v1448 = vrot.slane %v1439, 1
    %v1450 = vadd.f32 %v1448, %v1394
    %v1451 = vxor.u32 %v1450, 2147483648
    %v1452 = vmul.f32 %v1451, 1.442695
    %v1453 = vpow.pop %v1452
    %v1454 = vadd.f32 %v1453, 1.0
    %v1455 = vrcp.pop %v1454
    %v1456 = vmul.f32 1.0, %v1455
    %v1457 = vadd.f32 %v1433, %v379
    %v1458 = vmul.f32 %v1446, %v1457
    %v1459 = vrot.slane %v1439, 2
    %v1461 = vadd.f32 %v1459, %v1458
    %v1462 = vtanh.pop %v1461
    %v1463 = vsub.f32 1.0, %v1456
    %v1464 = vmul.f32 %v1463, %v1462
    %v1465 = vmul.f32 %v1456, %v1194
    %v1466 = vadd.f32 %v1464, %v1465
    %1467 = vst [vmem:[#allocation4 + $0x3] sm:$0x1] %v1466
    %v1468 = vpack.c.bf16 %v1466, %v1466
    %v1469 = vld [vmem:[#allocation12] sm:$0xff]
    %v1470 = vld [vmem:[#allocation12 + $0x8] sm:$0xf]
    %v1471 = vld [vmem:[#allocation12 + $0xc] sm:$0xff]
    %v1472 = vld [vmem:[#allocation12 + $0x14] sm:$0xf]
    %v1473 = vld [vmem:[#allocation12 + $0x18] sm:$0xff]
    %v1474 = vld [vmem:[#allocation12 + $0x20] sm:$0xf]
    %v1475 = vld [vmem:[#allocation12 + $0x24] sm:$0xff]
    %v1476 = vld [vmem:[#allocation12 + $0x2c] sm:$0xf]
    %v1477 = vld [vmem:[#allocation12 + $0x30] sm:$0xff]
    %v1478 = vld [vmem:[#allocation12 + $0x38] sm:$0xf]
    %v1479 = vld [vmem:[#allocation12 + $0x3c] sm:$0xff]
    %v1480 = vld [vmem:[#allocation12 + $0x44] sm:$0xf]
    %v1481 = vld [vmem:[#allocation12 + $0x48] sm:$0xff]
    %v1482 = vld [vmem:[#allocation12 + $0x50] sm:$0xf]
    %v1483 = vld [vmem:[#allocation12 + $0x54] sm:$0xff]
    %v1484 = vld [vmem:[#allocation12 + $0x5c] sm:$0xf]
    %v1485 = vld [vmem:[#allocation12 + $0x60] sm:$0xff]
    %v1486 = vld [vmem:[#allocation12 + $0x68] sm:$0xf]
    %v1487 = vld [vmem:[#allocation12 + $0x6c] sm:$0xff]
    %v1488 = vld [vmem:[#allocation12 + $0x74] sm:$0xf]
    %v1489 = vld [vmem:[#allocation12 + $0x78] sm:$0xff]
    %v1490 = vld [vmem:[#allocation12 + $0x80] sm:$0xf]
    %v1491 = vld [vmem:[#allocation12 + $0x84] sm:$0xff]
    %v1492 = vld [vmem:[#allocation12 + $0x8c] sm:$0xf]
    %v1493 = vld [vmem:[#allocation12 + $0x90] sm:$0xff]
    %v1494 = vld [vmem:[#allocation12 + $0x98] sm:$0xf]
    %v1495 = vld [vmem:[#allocation12 + $0x9c] sm:$0xff]
    %v1496 = vld [vmem:[#allocation12 + $0xa4] sm:$0xf]
    %v1497 = vld [vmem:[#allocation12 + $0xa8] sm:$0xff]
    %v1498 = vld [vmem:[#allocation12 + $0xb0] sm:$0xf]
    %v1499 = vld [vmem:[#allocation12 + $0xb4] sm:$0xff]
    %v1500 = vld [vmem:[#allocation12 + $0xbc] sm:$0xf]
    %v1533 = vunpack.c.l.b16 %v1469
    %v1534 = vunpack.c.h.b16 %v1469
    %v1535 = vunpack.c.l.b16 %v1470
    %v1536 = vunpack.c.l.b16 %v1471
    %v1537 = vunpack.c.h.b16 %v1471
    %v1538 = vunpack.c.l.b16 %v1472
    %v1539 = vunpack.c.l.b16 %v1473
    %v1540 = vunpack.c.h.b16 %v1473
    %v1541 = vunpack.c.l.b16 %v1474
    %v1542 = vunpack.c.l.b16 %v1475
    %v1543 = vunpack.c.h.b16 %v1475
    %v1544 = vunpack.c.l.b16 %v1476
    %v1545 = vunpack.c.l.b16 %v1477
    %v1546 = vunpack.c.h.b16 %v1477
    %v1547 = vunpack.c.l.b16 %v1478
    %v1548 = vunpack.c.l.b16 %v1479
    %v1549 = vunpack.c.h.b16 %v1479
    %v1550 = vunpack.c.l.b16 %v1480
    %v1551 = vunpack.c.l.b16 %v1481
    %v1552 = vunpack.c.h.b16 %v1481
    %v1553 = vunpack.c.l.b16 %v1482
    %v1554 = vunpack.c.l.b16 %v1483
    %v1555 = vunpack.c.h.b16 %v1483
    %v1556 = vunpack.c.l.b16 %v1484
    %v1557 = vunpack.c.l.b16 %v1485
    %v1558 = vunpack.c.h.b16 %v1485
    %v1559 = vunpack.c.l.b16 %v1486
    %v1560 = vunpack.c.l.b16 %v1487
    %v1561 = vunpack.c.h.b16 %v1487
    %v1562 = vunpack.c.l.b16 %v1488
    %v1563 = vunpack.c.l.b16 %v1489
    %v1564 = vunpack.c.h.b16 %v1489
    %v1565 = vunpack.c.l.b16 %v1490
    %v1566 = vunpack.c.l.b16 %v1491
    %v1567 = vunpack.c.h.b16 %v1491
    %v1568 = vunpack.c.l.b16 %v1492
    %v1569 = vunpack.c.l.b16 %v1493
    %v1570 = vunpack.c.h.b16 %v1493
    %v1571 = vunpack.c.l.b16 %v1494
    %v1572 = vunpack.c.l.b16 %v1495
    %v1573 = vunpack.c.h.b16 %v1495
    %v1574 = vunpack.c.l.b16 %v1496
    %v1575 = vunpack.c.l.b16 %v1497
    %v1576 = vunpack.c.h.b16 %v1497
    %v1577 = vunpack.c.l.b16 %v1498
    %v1578 = vunpack.c.l.b16 %v1499
    %v1579 = vunpack.c.h.b16 %v1499
    %v1580 = vunpack.c.l.b16 %v1500
    %v1581 = vpack.c.b16 %v1536, %v1533
    %v1582 = vpack.c.b16 %v1537, %v1534
    %v1583 = vpack.c.b16 %v1538, %v1535
    %v1584 = vpack.c.b16 %v1542, %v1539
    %v1585 = vpack.c.b16 %v1543, %v1540
    %v1586 = vpack.c.b16 %v1544, %v1541
    %v1587 = vpack.c.b16 %v1548, %v1545
    %v1588 = vpack.c.b16 %v1549, %v1546
    %v1589 = vpack.c.b16 %v1550, %v1547
    %v1590 = vpack.c.b16 %v1554, %v1551
    %v1591 = vpack.c.b16 %v1555, %v1552
    %v1592 = vpack.c.b16 %v1556, %v1553
    %v1593 = vpack.c.b16 %v1560, %v1557
    %v1594 = vpack.c.b16 %v1561, %v1558
    %v1595 = vpack.c.b16 %v1562, %v1559
    %v1596 = vpack.c.b16 %v1566, %v1563
    %v1597 = vpack.c.b16 %v1567, %v1564
    %v1598 = vpack.c.b16 %v1568, %v1565
    %v1599 = vpack.c.b16 %v1572, %v1569
    %v1600 = vpack.c.b16 %v1573, %v1570
    %v1601 = vpack.c.b16 %v1574, %v1571
    %v1602 = vpack.c.b16 %v1578, %v1575
    %v1603 = vpack.c.b16 %v1579, %v1576
    %v1604 = vpack.c.b16 %v1580, %v1577
    %1629 = vmatprep.subr.bf16.mxu0 %v1582
    %1630 = vmatpush1.bf16.msra.mxu0 %v1581
    %1631 = vmatprep.subr.bf16.mxu0 %v1585
    %1632 = vmatpush1.bf16.msra.mxu0 %v1584
    %1633 = vmatprep.subr.bf16.mxu0 %v1588
    %1634 = vmatpush1.bf16.msra.mxu0 %v1587
    %1635 = vmatprep.subr.bf16.mxu0 %v1591
    %1636 = vmatpush1.bf16.msra.mxu0 %v1590
    %1637 = vmatprep.subr.bf16.mxu0 %v1594
    %1638 = vmatpush1.bf16.msra.mxu0 %v1593
    %1639 = vmatprep.subr.bf16.mxu0 %v1597
    %1640 = vmatpush1.bf16.msra.mxu0 %v1596
    %1641 = vmatprep.subr.bf16.mxu0 %v1600
    %1642 = vmatpush1.bf16.msra.mxu0 %v1599
    %1643 = vmatprep.subr.bf16.mxu0 %v1603
    %1644 = vmatpush1.bf16.msra.mxu0 %v1602
    %1645 = vmatprep.subr.bf16.mxu0 0
    %1646 = vmatpush1.bf16.msra.mxu0 0
    %1647 = vmatprep.subr.bf16.mxu0 0
    %1648 = vmatpush1.bf16.msra.mxu0 0
    %1649 = vmatprep.subr.bf16.mxu0 0
    %1650 = vmatpush1.bf16.msra.mxu0 0
    %1651 = vmatprep.subr.bf16.mxu0 0
    %1652 = vmatpush1.bf16.msra.mxu0 0
    %1653 = vmatprep.subr.bf16.mxu0 0
    %1654 = vmatpush1.bf16.msra.mxu0 0
    %1655 = vmatprep.subr.bf16.mxu0 0
    %1656 = vmatpush1.bf16.msra.mxu0 0
    %1657 = vmatprep.subr.bf16.mxu0 0
    %1658 = vmatpush1.bf16.msra.mxu0 0
    %1659 = vmatprep.subr.bf16.mxu0 0
    %1660 = vmatpush1.bf16.msra.mxu0 0
    %1661 = vmatprep.mubr.bf16.mxu0 0
    %1662 = vmatmul.mubr.bf16.gmra.mrb[0].mxu0 %v1468
    %v1663 = vpop.f32.mrb[0].mxu0
    %v1664 = vadd.f32 0.0, %v1663
    %v1665 = vpop.f32.mrb[0].mxu0
    %v1666 = vadd.f32 0.0, %v1665
    %v1667 = vpop.f32.mrb[0].mxu0
    %v1668 = vpop.f32.mrb[0].mxu0
    %1669 = vdwg.mxu0
    %1670 = vmatprep.subr.bf16.mxu0 0
    %1671 = vmatpush1.bf16.msra.mxu0 %v1583
    %1672 = vmatprep.subr.bf16.mxu0 0
    %1673 = vmatpush1.bf16.msra.mxu0 %v1586
    %1674 = vmatprep.subr.bf16.mxu0 0
    %1675 = vmatpush1.bf16.msra.mxu0 %v1589
    %1676 = vmatprep.subr.bf16.mxu0 0
    %1677 = vmatpush1.bf16.msra.mxu0 %v1592
    %1678 = vmatprep.subr.bf16.mxu0 0
    %1679 = vmatpush1.bf16.msra.mxu0 %v1595
    %1680 = vmatprep.subr.bf16.mxu0 0
    %1681 = vmatpush1.bf16.msra.mxu0 %v1598
    %1682 = vmatprep.subr.bf16.mxu0 0
    %1683 = vmatpush1.bf16.msra.mxu0 %v1601
    %1684 = vmatprep.subr.bf16.mxu0 0
    %1685 = vmatpush1.bf16.msra.mxu0 %v1604
    %1686 = vmatprep.subr.bf16.mxu0 0
    %1687 = vmatpush1.bf16.msra.mxu0 0
    %1688 = vmatprep.subr.bf16.mxu0 0
    %1689 = vmatpush1.bf16.msra.mxu0 0
    %1690 = vmatprep.subr.bf16.mxu0 0
    %1691 = vmatpush1.bf16.msra.mxu0 0
    %1692 = vmatprep.subr.bf16.mxu0 0
    %1693 = vmatpush1.bf16.msra.mxu0 0
    %1694 = vmatprep.subr.bf16.mxu0 0
    %1695 = vmatpush1.bf16.msra.mxu0 0
    %1696 = vmatprep.subr.bf16.mxu0 0
    %1697 = vmatpush1.bf16.msra.mxu0 0
    %1698 = vmatprep.subr.bf16.mxu0 0
    %1699 = vmatpush1.bf16.msra.mxu0 0
    %1700 = vmatprep.subr.bf16.mxu0 0
    %1701 = vmatpush1.bf16.msra.mxu0 0
    %1702 = vmatprep.mubr.bf16.mxu0 0
    %1703 = vmatmul.mubr.bf16.gmra.mrb[0].mxu0 %v1468
    %v1704 = vpop.f32.mrb[0].mxu0
    %v1705 = vadd.f32 0.0, %v1704
    %v1706 = vpop.f32.mrb[0].mxu0
    %v1707 = vpop.f32.mrb[0].mxu0
    %v1708 = vpop.f32.mrb[0].mxu0
    %1709 = vdwg.mxu0
    %s1710 = scalar_lea.vmem [#allocation3], 4
    %v1711 = vld [vmem:[%s1710] ss:$8 sm:$0x7]
    %v1712 = vadd.f32 %v1711, %v1664
    %v1713 = vxor.u32 %v1712, 2147483648
    %v1714 = vmul.f32 %v1713, 1.442695
    %v1715 = vpow.pop %v1714
    %v1716 = vadd.f32 %v1715, 1.0
    %v1717 = vrcp.pop %v1716
    %v1718 = vmul.f32 1.0, %v1717
    %v1720 = vrot.slane %v1711, 1
    %v1722 = vadd.f32 %v1720, %v1666
    %v1723 = vxor.u32 %v1722, 2147483648
    %v1724 = vmul.f32 %v1723, 1.442695
    %v1725 = vpow.pop %v1724
    %v1726 = vadd.f32 %v1725, 1.0
    %v1727 = vrcp.pop %v1726
    %v1728 = vmul.f32 1.0, %v1727
    %v1729 = vadd.f32 %v1705, %v379
    %v1730 = vmul.f32 %v1718, %v1729
    %v1731 = vrot.slane %v1711, 2
    %v1733 = vadd.f32 %v1731, %v1730
    %v1734 = vtanh.pop %v1733
    %v1735 = vsub.f32 1.0, %v1728
    %v1736 = vmul.f32 %v1735, %v1734
    %v1737 = vmul.f32 %v1728, %v1466
    %v1738 = vadd.f32 %v1736, %v1737
    %1739 = vst [vmem:[#allocation4 + $0x4] sm:$0x1] %v1738
    %v1740 = vpack.c.bf16 %v1738, %v1738
    %v1741 = vld [vmem:[#allocation12] sm:$0xff]
    %v1742 = vld [vmem:[#allocation12 + $0x8] sm:$0xf]
    %v1743 = vld [vmem:[#allocation12 + $0xc] sm:$0xff]
    %v1744 = vld [vmem:[#allocation12 + $0x14] sm:$0xf]
    %v1745 = vld [vmem:[#allocation12 + $0x18] sm:$0xff]
    %v1746 = vld [vmem:[#allocation12 + $0x20] sm:$0xf]
    %v1747 = vld [vmem:[#allocation12 + $0x24] sm:$0xff]
    %v1748 = vld [vmem:[#allocation12 + $0x2c] sm:$0xf]
    %v1749 = vld [vmem:[#allocation12 + $0x30] sm:$0xff]
    %v1750 = vld [vmem:[#allocation12 + $0x38] sm:$0xf]
    %v1751 = vld [vmem:[#allocation12 + $0x3c] sm:$0xff]
    %v1752 = vld [vmem:[#allocation12 + $0x44] sm:$0xf]
    %v1753 = vld [vmem:[#allocation12 + $0x48] sm:$0xff]
    %v1754 = vld [vmem:[#allocation12 + $0x50] sm:$0xf]
    %v1755 = vld [vmem:[#allocation12 + $0x54] sm:$0xff]
    %v1756 = vld [vmem:[#allocation12 + $0x5c] sm:$0xf]
    %v1757 = vld [vmem:[#allocation12 + $0x60] sm:$0xff]
    %v1758 = vld [vmem:[#allocation12 + $0x68] sm:$0xf]
    %v1759 = vld [vmem:[#allocation12 + $0x6c] sm:$0xff]
    %v1760 = vld [vmem:[#allocation12 + $0x74] sm:$0xf]
    %v1761 = vld [vmem:[#allocation12 + $0x78] sm:$0xff]
    %v1762 = vld [vmem:[#allocation12 + $0x80] sm:$0xf]
    %v1763 = vld [vmem:[#allocation12 + $0x84] sm:$0xff]
    %v1764 = vld [vmem:[#allocation12 + $0x8c] sm:$0xf]
    %v1765 = vld [vmem:[#allocation12 + $0x90] sm:$0xff]
    %v1766 = vld [vmem:[#allocation12 + $0x98] sm:$0xf]
    %v1767 = vld [vmem:[#allocation12 + $0x9c] sm:$0xff]
    %v1768 = vld [vmem:[#allocation12 + $0xa4] sm:$0xf]
    %v1769 = vld [vmem:[#allocation12 + $0xa8] sm:$0xff]
    %v1770 = vld [vmem:[#allocation12 + $0xb0] sm:$0xf]
    %v1771 = vld [vmem:[#allocation12 + $0xb4] sm:$0xff]
    %v1772 = vld [vmem:[#allocation12 + $0xbc] sm:$0xf]
    %v1805 = vunpack.c.l.b16 %v1741
    %v1806 = vunpack.c.h.b16 %v1741
    %v1807 = vunpack.c.l.b16 %v1742
    %v1808 = vunpack.c.l.b16 %v1743
    %v1809 = vunpack.c.h.b16 %v1743
    %v1810 = vunpack.c.l.b16 %v1744
    %v1811 = vunpack.c.l.b16 %v1745
    %v1812 = vunpack.c.h.b16 %v1745
    %v1813 = vunpack.c.l.b16 %v1746
    %v1814 = vunpack.c.l.b16 %v1747
    %v1815 = vunpack.c.h.b16 %v1747
    %v1816 = vunpack.c.l.b16 %v1748
    %v1817 = vunpack.c.l.b16 %v1749
    %v1818 = vunpack.c.h.b16 %v1749
    %v1819 = vunpack.c.l.b16 %v1750
    %v1820 = vunpack.c.l.b16 %v1751
    %v1821 = vunpack.c.h.b16 %v1751
    %v1822 = vunpack.c.l.b16 %v1752
    %v1823 = vunpack.c.l.b16 %v1753
    %v1824 = vunpack.c.h.b16 %v1753
    %v1825 = vunpack.c.l.b16 %v1754
    %v1826 = vunpack.c.l.b16 %v1755
    %v1827 = vunpack.c.h.b16 %v1755
    %v1828 = vunpack.c.l.b16 %v1756
    %v1829 = vunpack.c.l.b16 %v1757
    %v1830 = vunpack.c.h.b16 %v1757
    %v1831 = vunpack.c.l.b16 %v1758
    %v1832 = vunpack.c.l.b16 %v1759
    %v1833 = vunpack.c.h.b16 %v1759
    %v1834 = vunpack.c.l.b16 %v1760
    %v1835 = vunpack.c.l.b16 %v1761
    %v1836 = vunpack.c.h.b16 %v1761
    %v1837 = vunpack.c.l.b16 %v1762
    %v1838 = vunpack.c.l.b16 %v1763
    %v1839 = vunpack.c.h.b16 %v1763
    %v1840 = vunpack.c.l.b16 %v1764
    %v1841 = vunpack.c.l.b16 %v1765
    %v1842 = vunpack.c.h.b16 %v1765
    %v1843 = vunpack.c.l.b16 %v1766
    %v1844 = vunpack.c.l.b16 %v1767
    %v1845 = vunpack.c.h.b16 %v1767
    %v1846 = vunpack.c.l.b16 %v1768
    %v1847 = vunpack.c.l.b16 %v1769
    %v1848 = vunpack.c.h.b16 %v1769
    %v1849 = vunpack.c.l.b16 %v1770
    %v1850 = vunpack.c.l.b16 %v1771
    %v1851 = vunpack.c.h.b16 %v1771
    %v1852 = vunpack.c.l.b16 %v1772
    %v1853 = vpack.c.b16 %v1808, %v1805
    %v1854 = vpack.c.b16 %v1809, %v1806
    %v1855 = vpack.c.b16 %v1810, %v1807
    %v1856 = vpack.c.b16 %v1814, %v1811
    %v1857 = vpack.c.b16 %v1815, %v1812
    %v1858 = vpack.c.b16 %v1816, %v1813
    %v1859 = vpack.c.b16 %v1820, %v1817
    %v1860 = vpack.c.b16 %v1821, %v1818
    %v1861 = vpack.c.b16 %v1822, %v1819
    %v1862 = vpack.c.b16 %v1826, %v1823
    %v1863 = vpack.c.b16 %v1827, %v1824
    %v1864 = vpack.c.b16 %v1828, %v1825
    %v1865 = vpack.c.b16 %v1832, %v1829
    %v1866 = vpack.c.b16 %v1833, %v1830
    %v1867 = vpack.c.b16 %v1834, %v1831
    %v1868 = vpack.c.b16 %v1838, %v1835
    %v1869 = vpack.c.b16 %v1839, %v1836
    %v1870 = vpack.c.b16 %v1840, %v1837
    %v1871 = vpack.c.b16 %v1844, %v1841
    %v1872 = vpack.c.b16 %v1845, %v1842
    %v1873 = vpack.c.b16 %v1846, %v1843
    %v1874 = vpack.c.b16 %v1850, %v1847
    %v1875 = vpack.c.b16 %v1851, %v1848
    %v1876 = vpack.c.b16 %v1852, %v1849
    %1901 = vmatprep.subr.bf16.mxu0 %v1854
    %1902 = vmatpush1.bf16.msra.mxu0 %v1853
    %1903 = vmatprep.subr.bf16.mxu0 %v1857
    %1904 = vmatpush1.bf16.msra.mxu0 %v1856
    %1905 = vmatprep.subr.bf16.mxu0 %v1860
    %1906 = vmatpush1.bf16.msra.mxu0 %v1859
    %1907 = vmatprep.subr.bf16.mxu0 %v1863
    %1908 = vmatpush1.bf16.msra.mxu0 %v1862
    %1909 = vmatprep.subr.bf16.mxu0 %v1866
    %1910 = vmatpush1.bf16.msra.mxu0 %v1865
    %1911 = vmatprep.subr.bf16.mxu0 %v1869
    %1912 = vmatpush1.bf16.msra.mxu0 %v1868
    %1913 = vmatprep.subr.bf16.mxu0 %v1872
    %1914 = vmatpush1.bf16.msra.mxu0 %v1871
    %1915 = vmatprep.subr.bf16.mxu0 %v1875
    %1916 = vmatpush1.bf16.msra.mxu0 %v1874
    %1917 = vmatprep.subr.bf16.mxu0 0
    %1918 = vmatpush1.bf16.msra.mxu0 0
    %1919 = vmatprep.subr.bf16.mxu0 0
    %1920 = vmatpush1.bf16.msra.mxu0 0
    %1921 = vmatprep.subr.bf16.mxu0 0
    %1922 = vmatpush1.bf16.msra.mxu0 0
    %1923 = vmatprep.subr.bf16.mxu0 0
    %1924 = vmatpush1.bf16.msra.mxu0 0
    %1925 = vmatprep.subr.bf16.mxu0 0
    %1926 = vmatpush1.bf16.msra.mxu0 0
    %1927 = vmatprep.subr.bf16.mxu0 0
    %1928 = vmatpush1.bf16.msra.mxu0 0
    %1929 = vmatprep.subr.bf16.mxu0 0
    %1930 = vmatpush1.bf16.msra.mxu0 0
    %1931 = vmatprep.subr.bf16.mxu0 0
    %1932 = vmatpush1.bf16.msra.mxu0 0
    %1933 = vmatprep.mubr.bf16.mxu0 0
    %1934 = vmatmul.mubr.bf16.gmra.mrb[0].mxu0 %v1740
    %v1935 = vpop.f32.mrb[0].mxu0
    %v1936 = vadd.f32 0.0, %v1935
    %v1937 = vpop.f32.mrb[0].mxu0
    %v1938 = vadd.f32 0.0, %v1937
    %v1939 = vpop.f32.mrb[0].mxu0
    %v1940 = vpop.f32.mrb[0].mxu0
    %1941 = vdwg.mxu0
    %1942 = vmatprep.subr.bf16.mxu0 0
    %1943 = vmatpush1.bf16.msra.mxu0 %v1855
    %1944 = vmatprep.subr.bf16.mxu0 0
    %1945 = vmatpush1.bf16.msra.mxu0 %v1858
    %1946 = vmatprep.subr.bf16.mxu0 0
    %1947 = vmatpush1.bf16.msra.mxu0 %v1861
    %1948 = vmatprep.subr.bf16.mxu0 0
    %1949 = vmatpush1.bf16.msra.mxu0 %v1864
    %1950 = vmatprep.subr.bf16.mxu0 0
    %1951 = vmatpush1.bf16.msra.mxu0 %v1867
    %1952 = vmatprep.subr.bf16.mxu0 0
    %1953 = vmatpush1.bf16.msra.mxu0 %v1870
    %1954 = vmatprep.subr.bf16.mxu0 0
    %1955 = vmatpush1.bf16.msra.mxu0 %v1873
    %1956 = vmatprep.subr.bf16.mxu0 0
    %1957 = vmatpush1.bf16.msra.mxu0 %v1876
    %1958 = vmatprep.subr.bf16.mxu0 0
    %1959 = vmatpush1.bf16.msra.mxu0 0
    %1960 = vmatprep.subr.bf16.mxu0 0
    %1961 = vmatpush1.bf16.msra.mxu0 0
    %1962 = vmatprep.subr.bf16.mxu0 0
    %1963 = vmatpush1.bf16.msra.mxu0 0
    %1964 = vmatprep.subr.bf16.mxu0 0
    %1965 = vmatpush1.bf16.msra.mxu0 0
    %1966 = vmatprep.subr.bf16.mxu0 0
    %1967 = vmatpush1.bf16.msra.mxu0 0
    %1968 = vmatprep.subr.bf16.mxu0 0
    %1969 = vmatpush1.bf16.msra.mxu0 0
    %1970 = vmatprep.subr.bf16.mxu0 0
    %1971 = vmatpush1.bf16.msra.mxu0 0
    %1972 = vmatprep.subr.bf16.mxu0 0
    %1973 = vmatpush1.bf16.msra.mxu0 0
    %1974 = vmatprep.mubr.bf16.mxu0 0
    %1975 = vmatmul.mubr.bf16.gmra.mrb[0].mxu0 %v1740
    %v1976 = vpop.f32.mrb[0].mxu0
    %v1977 = vadd.f32 0.0, %v1976
    %v1978 = vpop.f32.mrb[0].mxu0
    %v1979 = vpop.f32.mrb[0].mxu0
    %v1980 = vpop.f32.mrb[0].mxu0
    %1981 = vdwg.mxu0
    %s1982 = scalar_lea.vmem [#allocation3], 5
    %v1983 = vld [vmem:[%s1982] ss:$8 sm:$0x7]
    %v1984 = vadd.f32 %v1983, %v1936
    %v1985 = vxor.u32 %v1984, 2147483648
    %v1986 = vmul.f32 %v1985, 1.442695
    %v1987 = vpow.pop %v1986
    %v1988 = vadd.f32 %v1987, 1.0
    %v1989 = vrcp.pop %v1988
    %v1990 = vmul.f32 1.0, %v1989
    %v1992 = vrot.slane %v1983, 1
    %v1994 = vadd.f32 %v1992, %v1938
    %v1995 = vxor.u32 %v1994, 2147483648
    %v1996 = vmul.f32 %v1995, 1.442695
    %v1997 = vpow.pop %v1996
    %v1998 = vadd.f32 %v1997, 1.0
    %v1999 = vrcp.pop %v1998
    %v2000 = vmul.f32 1.0, %v1999
    %v2001 = vadd.f32 %v1977, %v379
    %v2002 = vmul.f32 %v1990, %v2001
    %v2003 = vrot.slane %v1983, 2
    %v2005 = vadd.f32 %v2003, %v2002
    %v2006 = vtanh.pop %v2005
    %v2007 = vsub.f32 1.0, %v2000
    %v2008 = vmul.f32 %v2007, %v2006
    %v2009 = vmul.f32 %v2000, %v1738
    %v2010 = vadd.f32 %v2008, %v2009
    %2011 = vst [vmem:[#allocation4 + $0x5] sm:$0x1] %v2010
    %v2012 = vpack.c.bf16 %v2010, %v2010
    %v2013 = vld [vmem:[#allocation12] sm:$0xff]
    %v2014 = vld [vmem:[#allocation12 + $0x8] sm:$0xf]
    %v2015 = vld [vmem:[#allocation12 + $0xc] sm:$0xff]
    %v2016 = vld [vmem:[#allocation12 + $0x14] sm:$0xf]
    %v2017 = vld [vmem:[#allocation12 + $0x18] sm:$0xff]
    %v2018 = vld [vmem:[#allocation12 + $0x20] sm:$0xf]
    %v2019 = vld [vmem:[#allocation12 + $0x24] sm:$0xff]
    %v2020 = vld [vmem:[#allocation12 + $0x2c] sm:$0xf]
    %v2021 = vld [vmem:[#allocation12 + $0x30] sm:$0xff]
    %v2022 = vld [vmem:[#allocation12 + $0x38] sm:$0xf]
    %v2023 = vld [vmem:[#allocation12 + $0x3c] sm:$0xff]
    %v2024 = vld [vmem:[#allocation12 + $0x44] sm:$0xf]
    %v2025 = vld [vmem:[#allocation12 + $0x48] sm:$0xff]
    %v2026 = vld [vmem:[#allocation12 + $0x50] sm:$0xf]
    %v2027 = vld [vmem:[#allocation12 + $0x54] sm:$0xff]
    %v2028 = vld [vmem:[#allocation12 + $0x5c] sm:$0xf]
    %v2029 = vld [vmem:[#allocation12 + $0x60] sm:$0xff]
    %v2030 = vld [vmem:[#allocation12 + $0x68] sm:$0xf]
    %v2031 = vld [vmem:[#allocation12 + $0x6c] sm:$0xff]
    %v2032 = vld [vmem:[#allocation12 + $0x74] sm:$0xf]
    %v2033 = vld [vmem:[#allocation12 + $0x78] sm:$0xff]
    %v2034 = vld [vmem:[#allocation12 + $0x80] sm:$0xf]
    %v2035 = vld [vmem:[#allocation12 + $0x84] sm:$0xff]
    %v2036 = vld [vmem:[#allocation12 + $0x8c] sm:$0xf]
    %v2037 = vld [vmem:[#allocation12 + $0x90] sm:$0xff]
    %v2038 = vld [vmem:[#allocation12 + $0x98] sm:$0xf]
    %v2039 = vld [vmem:[#allocation12 + $0x9c] sm:$0xff]
    %v2040 = vld [vmem:[#allocation12 + $0xa4] sm:$0xf]
    %v2041 = vld [vmem:[#allocation12 + $0xa8] sm:$0xff]
    %v2042 = vld [vmem:[#allocation12 + $0xb0] sm:$0xf]
    %v2043 = vld [vmem:[#allocation12 + $0xb4] sm:$0xff]
    %v2044 = vld [vmem:[#allocation12 + $0xbc] sm:$0xf]
    %v2077 = vunpack.c.l.b16 %v2013
    %v2078 = vunpack.c.h.b16 %v2013
    %v2079 = vunpack.c.l.b16 %v2014
    %v2080 = vunpack.c.l.b16 %v2015
    %v2081 = vunpack.c.h.b16 %v2015
    %v2082 = vunpack.c.l.b16 %v2016
    %v2083 = vunpack.c.l.b16 %v2017
    %v2084 = vunpack.c.h.b16 %v2017
    %v2085 = vunpack.c.l.b16 %v2018
    %v2086 = vunpack.c.l.b16 %v2019
    %v2087 = vunpack.c.h.b16 %v2019
    %v2088 = vunpack.c.l.b16 %v2020
    %v2089 = vunpack.c.l.b16 %v2021
    %v2090 = vunpack.c.h.b16 %v2021
    %v2091 = vunpack.c.l.b16 %v2022
    %v2092 = vunpack.c.l.b16 %v2023
    %v2093 = vunpack.c.h.b16 %v2023
    %v2094 = vunpack.c.l.b16 %v2024
    %v2095 = vunpack.c.l.b16 %v2025
    %v2096 = vunpack.c.h.b16 %v2025
    %v2097 = vunpack.c.l.b16 %v2026
    %v2098 = vunpack.c.l.b16 %v2027
    %v2099 = vunpack.c.h.b16 %v2027
    %v2100 = vunpack.c.l.b16 %v2028
    %v2101 = vunpack.c.l.b16 %v2029
    %v2102 = vunpack.c.h.b16 %v2029
    %v2103 = vunpack.c.l.b16 %v2030
    %v2104 = vunpack.c.l.b16 %v2031
    %v2105 = vunpack.c.h.b16 %v2031
    %v2106 = vunpack.c.l.b16 %v2032
    %v2107 = vunpack.c.l.b16 %v2033
    %v2108 = vunpack.c.h.b16 %v2033
    %v2109 = vunpack.c.l.b16 %v2034
    %v2110 = vunpack.c.l.b16 %v2035
    %v2111 = vunpack.c.h.b16 %v2035
    %v2112 = vunpack.c.l.b16 %v2036
    %v2113 = vunpack.c.l.b16 %v2037
    %v2114 = vunpack.c.h.b16 %v2037
    %v2115 = vunpack.c.l.b16 %v2038
    %v2116 = vunpack.c.l.b16 %v2039
    %v2117 = vunpack.c.h.b16 %v2039
    %v2118 = vunpack.c.l.b16 %v2040
    %v2119 = vunpack.c.l.b16 %v2041
    %v2120 = vunpack.c.h.b16 %v2041
    %v2121 = vunpack.c.l.b16 %v2042
    %v2122 = vunpack.c.l.b16 %v2043
    %v2123 = vunpack.c.h.b16 %v2043
    %v2124 = vunpack.c.l.b16 %v2044
    %v2125 = vpack.c.b16 %v2080, %v2077
    %v2126 = vpack.c.b16 %v2081, %v2078
    %v2127 = vpack.c.b16 %v2082, %v2079
    %v2128 = vpack.c.b16 %v2086, %v2083
    %v2129 = vpack.c.b16 %v2087, %v2084
    %v2130 = vpack.c.b16 %v2088, %v2085
    %v2131 = vpack.c.b16 %v2092, %v2089
    %v2132 = vpack.c.b16 %v2093, %v2090
    %v2133 = vpack.c.b16 %v2094, %v2091
    %v2134 = vpack.c.b16 %v2098, %v2095
    %v2135 = vpack.c.b16 %v2099, %v2096
    %v2136 = vpack.c.b16 %v2100, %v2097
    %v2137 = vpack.c.b16 %v2104, %v2101
    %v2138 = vpack.c.b16 %v2105, %v2102
    %v2139 = vpack.c.b16 %v2106, %v2103
    %v2140 = vpack.c.b16 %v2110, %v2107
    %v2141 = vpack.c.b16 %v2111, %v2108
    %v2142 = vpack.c.b16 %v2112, %v2109
    %v2143 = vpack.c.b16 %v2116, %v2113
    %v2144 = vpack.c.b16 %v2117, %v2114
    %v2145 = vpack.c.b16 %v2118, %v2115
    %v2146 = vpack.c.b16 %v2122, %v2119
    %v2147 = vpack.c.b16 %v2123, %v2120
    %v2148 = vpack.c.b16 %v2124, %v2121
    %2173 = vmatprep.subr.bf16.mxu0 %v2126
    %2174 = vmatpush1.bf16.msra.mxu0 %v2125
    %2175 = vmatprep.subr.bf16.mxu0 %v2129
    %2176 = vmatpush1.bf16.msra.mxu0 %v2128
    %2177 = vmatprep.subr.bf16.mxu0 %v2132
    %2178 = vmatpush1.bf16.msra.mxu0 %v2131
    %2179 = vmatprep.subr.bf16.mxu0 %v2135
    %2180 = vmatpush1.bf16.msra.mxu0 %v2134
    %2181 = vmatprep.subr.bf16.mxu0 %v2138
    %2182 = vmatpush1.bf16.msra.mxu0 %v2137
    %2183 = vmatprep.subr.bf16.mxu0 %v2141
    %2184 = vmatpush1.bf16.msra.mxu0 %v2140
    %2185 = vmatprep.subr.bf16.mxu0 %v2144
    %2186 = vmatpush1.bf16.msra.mxu0 %v2143
    %2187 = vmatprep.subr.bf16.mxu0 %v2147
    %2188 = vmatpush1.bf16.msra.mxu0 %v2146
    %2189 = vmatprep.subr.bf16.mxu0 0
    %2190 = vmatpush1.bf16.msra.mxu0 0
    %2191 = vmatprep.subr.bf16.mxu0 0
    %2192 = vmatpush1.bf16.msra.mxu0 0
    %2193 = vmatprep.subr.bf16.mxu0 0
    %2194 = vmatpush1.bf16.msra.mxu0 0
    %2195 = vmatprep.subr.bf16.mxu0 0
    %2196 = vmatpush1.bf16.msra.mxu0 0
    %2197 = vmatprep.subr.bf16.mxu0 0
    %2198 = vmatpush1.bf16.msra.mxu0 0
    %2199 = vmatprep.subr.bf16.mxu0 0
    %2200 = vmatpush1.bf16.msra.mxu0 0
    %2201 = vmatprep.subr.bf16.mxu0 0
    %2202 = vmatpush1.bf16.msra.mxu0 0
    %2203 = vmatprep.subr.bf16.mxu0 0
    %2204 = vmatpush1.bf16.msra.mxu0 0
    %2205 = vmatprep.mubr.bf16.mxu0 0
    %2206 = vmatmul.mubr.bf16.gmra.mrb[0].mxu0 %v2012
    %v2207 = vpop.f32.mrb[0].mxu0
    %v2208 = vadd.f32 0.0, %v2207
    %v2209 = vpop.f32.mrb[0].mxu0
    %v2210 = vadd.f32 0.0, %v2209
    %v2211 = vpop.f32.mrb[0].mxu0
    %v2212 = vpop.f32.mrb[0].mxu0
    %2213 = vdwg.mxu0
    %2214 = vmatprep.subr.bf16.mxu0 0
    %2215 = vmatpush1.bf16.msra.mxu0 %v2127
    %2216 = vmatprep.subr.bf16.mxu0 0
    %2217 = vmatpush1.bf16.msra.mxu0 %v2130
    %2218 = vmatprep.subr.bf16.mxu0 0
    %2219 = vmatpush1.bf16.msra.mxu0 %v2133
    %2220 = vmatprep.subr.bf16.mxu0 0
    %2221 = vmatpush1.bf16.msra.mxu0 %v2136
    %2222 = vmatprep.subr.bf16.mxu0 0
    %2223 = vmatpush1.bf16.msra.mxu0 %v2139
    %2224 = vmatprep.subr.bf16.mxu0 0
    %2225 = vmatpush1.bf16.msra.mxu0 %v2142
    %2226 = vmatprep.subr.bf16.mxu0 0
    %2227 = vmatpush1.bf16.msra.mxu0 %v2145
    %2228 = vmatprep.subr.bf16.mxu0 0
    %2229 = vmatpush1.bf16.msra.mxu0 %v2148
    %2230 = vmatprep.subr.bf16.mxu0 0
    %2231 = vmatpush1.bf16.msra.mxu0 0
    %2232 = vmatprep.subr.bf16.mxu0 0
    %2233 = vmatpush1.bf16.msra.mxu0 0
    %2234 = vmatprep.subr.bf16.mxu0 0
    %2235 = vmatpush1.bf16.msra.mxu0 0
    %2236 = vmatprep.subr.bf16.mxu0 0
    %2237 = vmatpush1.bf16.msra.mxu0 0
    %2238 = vmatprep.subr.bf16.mxu0 0
    %2239 = vmatpush1.bf16.msra.mxu0 0
    %2240 = vmatprep.subr.bf16.mxu0 0
    %2241 = vmatpush1.bf16.msra.mxu0 0
    %2242 = vmatprep.subr.bf16.mxu0 0
    %2243 = vmatpush1.bf16.msra.mxu0 0
    %2244 = vmatprep.subr.bf16.mxu0 0
    %2245 = vmatpush1.bf16.msra.mxu0 0
    %2246 = vmatprep.mubr.bf16.mxu0 0
    %2247 = vmatmul.mubr.bf16.gmra.mrb[0].mxu0 %v2012
    %v2248 = vpop.f32.mrb[0].mxu0
    %v2249 = vadd.f32 0.0, %v2248
    %v2250 = vpop.f32.mrb[0].mxu0
    %v2251 = vpop.f32.mrb[0].mxu0
    %v2252 = vpop.f32.mrb[0].mxu0
    %2253 = vdwg.mxu0
    %s2254 = scalar_lea.vmem [#allocation3], 6
    %v2255 = vld [vmem:[%s2254] ss:$8 sm:$0x7]
    %v2256 = vadd.f32 %v2255, %v2208
    %v2257 = vxor.u32 %v2256, 2147483648
    %v2258 = vmul.f32 %v2257, 1.442695
    %v2259 = vpow.pop %v2258
    %v2260 = vadd.f32 %v2259, 1.0
    %v2261 = vrcp.pop %v2260
    %v2262 = vmul.f32 1.0, %v2261
    %v2264 = vrot.slane %v2255, 1
    %v2266 = vadd.f32 %v2264, %v2210
    %v2267 = vxor.u32 %v2266, 2147483648
    %v2268 = vmul.f32 %v2267, 1.442695
    %v2269 = vpow.pop %v2268
    %v2270 = vadd.f32 %v2269, 1.0
    %v2271 = vrcp.pop %v2270
    %v2272 = vmul.f32 1.0, %v2271
    %v2273 = vadd.f32 %v2249, %v379
    %v2274 = vmul.f32 %v2262, %v2273
    %v2275 = vrot.slane %v2255, 2
    %v2277 = vadd.f32 %v2275, %v2274
    %v2278 = vtanh.pop %v2277
    %v2279 = vsub.f32 1.0, %v2272
    %v2280 = vmul.f32 %v2279, %v2278
    %v2281 = vmul.f32 %v2272, %v2010
    %v2282 = vadd.f32 %v2280, %v2281
    %2283 = vst [vmem:[#allocation4 + $0x6] sm:$0x1] %v2282
    %v2284 = vpack.c.bf16 %v2282, %v2282
    %v2285 = vld [vmem:[#allocation12] sm:$0xff]
    %v2286 = vld [vmem:[#allocation12 + $0x8] sm:$0xf]
    %v2287 = vld [vmem:[#allocation12 + $0xc] sm:$0xff]
    %v2288 = vld [vmem:[#allocation12 + $0x14] sm:$0xf]
    %v2289 = vld [vmem:[#allocation12 + $0x18] sm:$0xff]
    %v2290 = vld [vmem:[#allocation12 + $0x20] sm:$0xf]
    %v2291 = vld [vmem:[#allocation12 + $0x24] sm:$0xff]
    %v2292 = vld [vmem:[#allocation12 + $0x2c] sm:$0xf]
    %v2293 = vld [vmem:[#allocation12 + $0x30] sm:$0xff]
    %v2294 = vld [vmem:[#allocation12 + $0x38] sm:$0xf]
    %v2295 = vld [vmem:[#allocation12 + $0x3c] sm:$0xff]
    %v2296 = vld [vmem:[#allocation12 + $0x44] sm:$0xf]
    %v2297 = vld [vmem:[#allocation12 + $0x48] sm:$0xff]
    %v2298 = vld [vmem:[#allocation12 + $0x50] sm:$0xf]
    %v2299 = vld [vmem:[#allocation12 + $0x54] sm:$0xff]
    %v2300 = vld [vmem:[#allocation12 + $0x5c] sm:$0xf]
    %v2301 = vld [vmem:[#allocation12 + $0x60] sm:$0xff]
    %v2302 = vld [vmem:[#allocation12 + $0x68] sm:$0xf]
    %v2303 = vld [vmem:[#allocation12 + $0x6c] sm:$0xff]
    %v2304 = vld [vmem:[#allocation12 + $0x74] sm:$0xf]
    %v2305 = vld [vmem:[#allocation12 + $0x78] sm:$0xff]
    %v2306 = vld [vmem:[#allocation12 + $0x80] sm:$0xf]
    %v2307 = vld [vmem:[#allocation12 + $0x84] sm:$0xff]
    %v2308 = vld [vmem:[#allocation12 + $0x8c] sm:$0xf]
    %v2309 = vld [vmem:[#allocation12 + $0x90] sm:$0xff]
    %v2310 = vld [vmem:[#allocation12 + $0x98] sm:$0xf]
    %v2311 = vld [vmem:[#allocation12 + $0x9c] sm:$0xff]
    %v2312 = vld [vmem:[#allocation12 + $0xa4] sm:$0xf]
    %v2313 = vld [vmem:[#allocation12 + $0xa8] sm:$0xff]
    %v2314 = vld [vmem:[#allocation12 + $0xb0] sm:$0xf]
    %v2315 = vld [vmem:[#allocation12 + $0xb4] sm:$0xff]
    %v2316 = vld [vmem:[#allocation12 + $0xbc] sm:$0xf]
    %v2349 = vunpack.c.l.b16 %v2285
    %v2350 = vunpack.c.h.b16 %v2285
    %v2351 = vunpack.c.l.b16 %v2286
    %v2352 = vunpack.c.l.b16 %v2287
    %v2353 = vunpack.c.h.b16 %v2287
    %v2354 = vunpack.c.l.b16 %v2288
    %v2355 = vunpack.c.l.b16 %v2289
    %v2356 = vunpack.c.h.b16 %v2289
    %v2357 = vunpack.c.l.b16 %v2290
    %v2358 = vunpack.c.l.b16 %v2291
    %v2359 = vunpack.c.h.b16 %v2291
    %v2360 = vunpack.c.l.b16 %v2292
    %v2361 = vunpack.c.l.b16 %v2293
    %v2362 = vunpack.c.h.b16 %v2293
    %v2363 = vunpack.c.l.b16 %v2294
    %v2364 = vunpack.c.l.b16 %v2295
    %v2365 = vunpack.c.h.b16 %v2295
    %v2366 = vunpack.c.l.b16 %v2296
    %v2367 = vunpack.c.l.b16 %v2297
    %v2368 = vunpack.c.h.b16 %v2297
    %v2369 = vunpack.c.l.b16 %v2298
    %v2370 = vunpack.c.l.b16 %v2299
    %v2371 = vunpack.c.h.b16 %v2299
    %v2372 = vunpack.c.l.b16 %v2300
    %v2373 = vunpack.c.l.b16 %v2301
    %v2374 = vunpack.c.h.b16 %v2301
    %v2375 = vunpack.c.l.b16 %v2302
    %v2376 = vunpack.c.l.b16 %v2303
    %v2377 = vunpack.c.h.b16 %v2303
    %v2378 = vunpack.c.l.b16 %v2304
    %v2379 = vunpack.c.l.b16 %v2305
    %v2380 = vunpack.c.h.b16 %v2305
    %v2381 = vunpack.c.l.b16 %v2306
    %v2382 = vunpack.c.l.b16 %v2307
    %v2383 = vunpack.c.h.b16 %v2307
    %v2384 = vunpack.c.l.b16 %v2308
    %v2385 = vunpack.c.l.b16 %v2309
    %v2386 = vunpack.c.h.b16 %v2309
    %v2387 = vunpack.c.l.b16 %v2310
    %v2388 = vunpack.c.l.b16 %v2311
    %v2389 = vunpack.c.h.b16 %v2311
    %v2390 = vunpack.c.l.b16 %v2312
    %v2391 = vunpack.c.l.b16 %v2313
    %v2392 = vunpack.c.h.b16 %v2313
    %v2393 = vunpack.c.l.b16 %v2314
    %v2394 = vunpack.c.l.b16 %v2315
    %v2395 = vunpack.c.h.b16 %v2315
    %v2396 = vunpack.c.l.b16 %v2316
    %v2397 = vpack.c.b16 %v2352, %v2349
    %v2398 = vpack.c.b16 %v2353, %v2350
    %v2399 = vpack.c.b16 %v2354, %v2351
    %v2400 = vpack.c.b16 %v2358, %v2355
    %v2401 = vpack.c.b16 %v2359, %v2356
    %v2402 = vpack.c.b16 %v2360, %v2357
    %v2403 = vpack.c.b16 %v2364, %v2361
    %v2404 = vpack.c.b16 %v2365, %v2362
    %v2405 = vpack.c.b16 %v2366, %v2363
    %v2406 = vpack.c.b16 %v2370, %v2367
    %v2407 = vpack.c.b16 %v2371, %v2368
    %v2408 = vpack.c.b16 %v2372, %v2369
    %v2409 = vpack.c.b16 %v2376, %v2373
    %v2410 = vpack.c.b16 %v2377, %v2374
    %v2411 = vpack.c.b16 %v2378, %v2375
    %v2412 = vpack.c.b16 %v2382, %v2379
    %v2413 = vpack.c.b16 %v2383, %v2380
    %v2414 = vpack.c.b16 %v2384, %v2381
    %v2415 = vpack.c.b16 %v2388, %v2385
    %v2416 = vpack.c.b16 %v2389, %v2386
    %v2417 = vpack.c.b16 %v2390, %v2387
    %v2418 = vpack.c.b16 %v2394, %v2391
    %v2419 = vpack.c.b16 %v2395, %v2392
    %v2420 = vpack.c.b16 %v2396, %v2393
    %2445 = vmatprep.subr.bf16.mxu0 %v2398
    %2446 = vmatpush1.bf16.msra.mxu0 %v2397
    %2447 = vmatprep.subr.bf16.mxu0 %v2401
    %2448 = vmatpush1.bf16.msra.mxu0 %v2400
    %2449 = vmatprep.subr.bf16.mxu0 %v2404
    %2450 = vmatpush1.bf16.msra.mxu0 %v2403
    %2451 = vmatprep.subr.bf16.mxu0 %v2407
    %2452 = vmatpush1.bf16.msra.mxu0 %v2406
    %2453 = vmatprep.subr.bf16.mxu0 %v2410
    %2454 = vmatpush1.bf16.msra.mxu0 %v2409
    %2455 = vmatprep.subr.bf16.mxu0 %v2413
    %2456 = vmatpush1.bf16.msra.mxu0 %v2412
    %2457 = vmatprep.subr.bf16.mxu0 %v2416
    %2458 = vmatpush1.bf16.msra.mxu0 %v2415
    %2459 = vmatprep.subr.bf16.mxu0 %v2419
    %2460 = vmatpush1.bf16.msra.mxu0 %v2418
    %2461 = vmatprep.subr.bf16.mxu0 0
    %2462 = vmatpush1.bf16.msra.mxu0 0
    %2463 = vmatprep.subr.bf16.mxu0 0
    %2464 = vmatpush1.bf16.msra.mxu0 0
    %2465 = vmatprep.subr.bf16.mxu0 0
    %2466 = vmatpush1.bf16.msra.mxu0 0
    %2467 = vmatprep.subr.bf16.mxu0 0
    %2468 = vmatpush1.bf16.msra.mxu0 0
    %2469 = vmatprep.subr.bf16.mxu0 0
    %2470 = vmatpush1.bf16.msra.mxu0 0
    %2471 = vmatprep.subr.bf16.mxu0 0
    %2472 = vmatpush1.bf16.msra.mxu0 0
    %2473 = vmatprep.subr.bf16.mxu0 0
    %2474 = vmatpush1.bf16.msra.mxu0 0
    %2475 = vmatprep.subr.bf16.mxu0 0
    %2476 = vmatpush1.bf16.msra.mxu0 0
    %2477 = vmatprep.mubr.bf16.mxu0 0
    %2478 = vmatmul.mubr.bf16.gmra.mrb[0].mxu0 %v2284
    %v2479 = vpop.f32.mrb[0].mxu0
    %v2480 = vadd.f32 0.0, %v2479
    %v2481 = vpop.f32.mrb[0].mxu0
    %v2482 = vadd.f32 0.0, %v2481
    %v2483 = vpop.f32.mrb[0].mxu0
    %v2484 = vpop.f32.mrb[0].mxu0
    %2485 = vdwg.mxu0
    %2486 = vmatprep.subr.bf16.mxu0 0
    %2487 = vmatpush1.bf16.msra.mxu0 %v2399
    %2488 = vmatprep.subr.bf16.mxu0 0
    %2489 = vmatpush1.bf16.msra.mxu0 %v2402
    %2490 = vmatprep.subr.bf16.mxu0 0
    %2491 = vmatpush1.bf16.msra.mxu0 %v2405
    %2492 = vmatprep.subr.bf16.mxu0 0
    %2493 = vmatpush1.bf16.msra.mxu0 %v2408
    %2494 = vmatprep.subr.bf16.mxu0 0
    %2495 = vmatpush1.bf16.msra.mxu0 %v2411
    %2496 = vmatprep.subr.bf16.mxu0 0
    %2497 = vmatpush1.bf16.msra.mxu0 %v2414
    %2498 = vmatprep.subr.bf16.mxu0 0
    %2499 = vmatpush1.bf16.msra.mxu0 %v2417
    %2500 = vmatprep.subr.bf16.mxu0 0
    %2501 = vmatpush1.bf16.msra.mxu0 %v2420
    %2502 = vmatprep.subr.bf16.mxu0 0
    %2503 = vmatpush1.bf16.msra.mxu0 0
    %2504 = vmatprep.subr.bf16.mxu0 0
    %2505 = vmatpush1.bf16.msra.mxu0 0
    %2506 = vmatprep.subr.bf16.mxu0 0
    %2507 = vmatpush1.bf16.msra.mxu0 0
    %2508 = vmatprep.subr.bf16.mxu0 0
    %2509 = vmatpush1.bf16.msra.mxu0 0
    %2510 = vmatprep.subr.bf16.mxu0 0
    %2511 = vmatpush1.bf16.msra.mxu0 0
    %2512 = vmatprep.subr.bf16.mxu0 0
    %2513 = vmatpush1.bf16.msra.mxu0 0
    %2514 = vmatprep.subr.bf16.mxu0 0
    %2515 = vmatpush1.bf16.msra.mxu0 0
    %2516 = vmatprep.subr.bf16.mxu0 0
    %2517 = vmatpush1.bf16.msra.mxu0 0
    %2518 = vmatprep.mubr.bf16.mxu0 0
    %2519 = vmatmul.mubr.bf16.gmra.mrb[0].mxu0 %v2284
    %v2520 = vpop.f32.mrb[0].mxu0
    %v2521 = vadd.f32 0.0, %v2520
    %v2522 = vpop.f32.mrb[0].mxu0
    %v2523 = vpop.f32.mrb[0].mxu0
    %v2524 = vpop.f32.mrb[0].mxu0
    %2525 = vdwg.mxu0
    %s2526 = scalar_lea.vmem [#allocation3], 7
    %v2527 = vld [vmem:[%s2526] ss:$8 sm:$0x7]
    %v2528 = vadd.f32 %v2527, %v2480
    %v2529 = vxor.u32 %v2528, 2147483648
    %v2530 = vmul.f32 %v2529, 1.442695
    %v2531 = vpow.pop %v2530
    %v2532 = vadd.f32 %v2531, 1.0
    %v2533 = vrcp.pop %v2532
    %v2534 = vmul.f32 1.0, %v2533
    %v2536 = vrot.slane %v2527, 1
    %v2538 = vadd.f32 %v2536, %v2482
    %v2539 = vxor.u32 %v2538, 2147483648
    %v2540 = vmul.f32 %v2539, 1.442695
    %v2541 = vpow.pop %v2540
    %v2542 = vadd.f32 %v2541, 1.0
    %v2543 = vrcp.pop %v2542
    %v2544 = vmul.f32 1.0, %v2543
    %v2545 = vadd.f32 %v2521, %v379
    %v2546 = vmul.f32 %v2534, %v2545
    %v2547 = vrot.slane %v2527, 2
    %v2549 = vadd.f32 %v2547, %v2546
    %v2550 = vtanh.pop %v2549
    %v2551 = vsub.f32 1.0, %v2544
    %v2552 = vmul.f32 %v2551, %v2550
    %v2553 = vmul.f32 %v2544, %v2282
    %v2554 = vadd.f32 %v2552, %v2553
    %2555 = vst [vmem:[#allocation4 + $0x7] sm:$0x1] %v2554
    %2556 = vst [vmem:[#allocation16] sm:$0x1] %v2554
    %v2557 = vld [vmem:[#allocation4] sm:$0xff]
    %v2558 = vpack.c.bf16 %v2557, %v2557
    %v2559 = vld [vmem:[#allocation13] sm:$0xf]
    %v2560 = vld [vmem:[#allocation13 + $0x4] sm:$0xf]
    %v2561 = vld [vmem:[#allocation13 + $0x8] sm:$0xf]
    %v2562 = vld [vmem:[#allocation13 + $0xc] sm:$0xf]
    %v2563 = vld [vmem:[#allocation13 + $0x10] sm:$0xf]
    %v2564 = vld [vmem:[#allocation13 + $0x14] sm:$0xf]
    %v2565 = vld [vmem:[#allocation13 + $0x18] sm:$0xf]
    %v2566 = vld [vmem:[#allocation13 + $0x1c] sm:$0xf]
    %v2567 = vld [vmem:[#allocation13 + $0x20] sm:$0xf]
    %v2568 = vld [vmem:[#allocation13 + $0x24] sm:$0xf]
    %v2569 = vld [vmem:[#allocation13 + $0x28] sm:$0xf]
    %v2570 = vld [vmem:[#allocation13 + $0x2c] sm:$0xf]
    %v2571 = vld [vmem:[#allocation13 + $0x30] sm:$0xf]
    %v2572 = vld [vmem:[#allocation13 + $0x34] sm:$0xf]
    %v2573 = vld [vmem:[#allocation13 + $0x38] sm:$0xf]
    %v2574 = vld [vmem:[#allocation13 + $0x3c] sm:$0xf]
    %v2575 = vld [vmem:[%s8] sm:$0x1]
    %v2577 = vlaneseq
    %v2578 = vshrl.u32 %v2577, 7
    %v2579 = vsub.s32 0, %v2578
    %v2580 = vrot.slane %v2575, %v2579
    %v2598 = vunpack.c.l.b16 %v2559
    %v2599 = vunpack.c.l.b16 %v2560
    %v2600 = vunpack.c.l.b16 %v2561
    %v2601 = vunpack.c.l.b16 %v2562
    %v2602 = vunpack.c.l.b16 %v2563
    %v2603 = vunpack.c.l.b16 %v2564
    %v2604 = vunpack.c.l.b16 %v2565
    %v2605 = vunpack.c.l.b16 %v2566
    %v2606 = vunpack.c.l.b16 %v2567
    %v2607 = vunpack.c.l.b16 %v2568
    %v2608 = vunpack.c.l.b16 %v2569
    %v2609 = vunpack.c.l.b16 %v2570
    %v2610 = vunpack.c.l.b16 %v2571
    %v2611 = vunpack.c.l.b16 %v2572
    %v2612 = vunpack.c.l.b16 %v2573
    %v2613 = vunpack.c.l.b16 %v2574
    %v2614 = vpack.c.b16 %v2599, %v2598
    %v2615 = vpack.c.b16 %v2601, %v2600
    %v2616 = vpack.c.b16 %v2603, %v2602
    %v2617 = vpack.c.b16 %v2605, %v2604
    %v2618 = vpack.c.b16 %v2607, %v2606
    %v2619 = vpack.c.b16 %v2609, %v2608
    %v2620 = vpack.c.b16 %v2611, %v2610
    %v2621 = vpack.c.b16 %v2613, %v2612
    %2630 = vmatprep.subr.bf16.mxu0 0
    %2631 = vmatpush1.bf16.msra.mxu0 %v2614
    %2632 = vmatprep.subr.bf16.mxu0 0
    %2633 = vmatpush1.bf16.msra.mxu0 %v2615
    %2634 = vmatprep.subr.bf16.mxu0 0
    %2635 = vmatpush1.bf16.msra.mxu0 %v2616
    %2636 = vmatprep.subr.bf16.mxu0 0
    %2637 = vmatpush1.bf16.msra.mxu0 %v2617
    %2638 = vmatprep.subr.bf16.mxu0 0
    %2639 = vmatpush1.bf16.msra.mxu0 %v2618
    %2640 = vmatprep.subr.bf16.mxu0 0
    %2641 = vmatpush1.bf16.msra.mxu0 %v2619
    %2642 = vmatprep.subr.bf16.mxu0 0
    %2643 = vmatpush1.bf16.msra.mxu0 %v2620
    %2644 = vmatprep.subr.bf16.mxu0 0
    %2645 = vmatpush1.bf16.msra.mxu0 %v2621
    %2646 = vmatprep.subr.bf16.mxu0 0
    %2647 = vmatpush1.bf16.msra.mxu0 0
    %2648 = vmatprep.subr.bf16.mxu0 0
    %2649 = vmatpush1.bf16.msra.mxu0 0
    %2650 = vmatprep.subr.bf16.mxu0 0
    %2651 = vmatpush1.bf16.msra.mxu0 0
    %2652 = vmatprep.subr.bf16.mxu0 0
    %2653 = vmatpush1.bf16.msra.mxu0 0
    %2654 = vmatprep.subr.bf16.mxu0 0
    %2655 = vmatpush1.bf16.msra.mxu0 0
    %2656 = vmatprep.subr.bf16.mxu0 0
    %2657 = vmatpush1.bf16.msra.mxu0 0
    %2658 = vmatprep.subr.bf16.mxu0 0
    %2659 = vmatpush1.bf16.msra.mxu0 0
    %2660 = vmatprep.subr.bf16.mxu0 0
    %2661 = vmatpush1.bf16.msra.mxu0 0
    %2662 = vmatprep.mubr.bf16.mxu0 0
    %2663 = vmatmul.mubr.bf16.gmra.mrb[0].mxu0 %v2558
    %v2664 = vpop.f32.mrb[0].mxu0
    %v2665 = vadd.f32 %v2580, %v2664
    %v2666 = vpop.f32.mrb[0].mxu0
    %v2667 = vpop.f32.mrb[0].mxu0
    %v2668 = vpop.f32.mrb[0].mxu0
    %2669 = vdwg.mxu0
    %2670 = vst [vmem:[#allocation15] sm:$0xff] %v2665
    // Predicated region
    $region65: #{tpu_custom_call.1} parent=1 // pred_check
      _
    $region66: #{tpu_custom_call.1} parent=1 // pred_check_branch
      %2672 = sbr.rel (0) target = $region68
    $region67: #{tpu_custom_call.1} parent=1 // pred_region
      %s2674 = ssub.s32 128, 128
      %2675 = vsyncadd [#allocation7], %s2674
      %s2677 = sshll.u32 [#allocation15], 4
      %s2678 = int_to_ptr.vmem [resolvable:$true] %s2677
      %2680 = dma.vmem_to_hbm [thread:$0]  %s2678, 128, %s9, [#allocation7]
    $region68: #{tpu_custom_call.1} parent=1 // pred_fallthru
      _
    // Predicated region
    $region69: #{tpu_custom_call.1} parent=1 // pred_check
      _
    $region70: #{tpu_custom_call.1} parent=1 // pred_check_branch
      %2682 = sbr.rel (0) target = $region72
    $region71: #{tpu_custom_call.1} parent=1 // pred_region
      %s2684 = ssub.s32 16, 16
      %2685 = vsyncadd [#allocation17], %s2684
      %s2687 = sshll.u32 [#allocation16], 4
      %s2688 = int_to_ptr.vmem [resolvable:$true] %s2687
      %2690 = dma.vmem_to_hbm [thread:$0]  %s2688, 16, %s10, [#allocation17]
    $region72: #{tpu_custom_call.1} parent=1 // pred_fallthru
      _
    // Predicated region
    $region73: #{tpu_custom_call.1} parent=1 // pred_check
      _
    $region74: #{tpu_custom_call.1} parent=1 // pred_check_branch
      %2692 = sbr.rel (0) target = $region76
    $region75: #{tpu_custom_call.1} parent=1 // pred_region
      %2693 = dma.done [#allocation7], 128
    $region76: #{tpu_custom_call.1} parent=1 // pred_fallthru
      _
    // Predicated region
    $region77: #{tpu_custom_call.1} parent=1 // pred_check
      _
    $region78: #{tpu_custom_call.1} parent=1 // pred_check_branch
      %2695 = sbr.rel (0) target = $region80
    $region79: #{tpu_custom_call.1} parent=1 // pred_region
      %2696 = dma.done [#allocation17], 16
    $region80: #{tpu_custom_call.1} parent=1 // pred_fallthru
      _
    %2697 = vsyncpa [#allocation6], 1
    %2698 = vsyncpa [#allocation11], 1
    %2699 = vsyncpa [#allocation14], 1
    %2700 = vsyncpa [#allocation7], 1
    %2701 = vsyncpa [#allocation17], 1
    %2702 = vsyncpa [#allocation8], 1

</llo_original>
